<compile_context>
chip_gen: v5e
topology: v5e:2x2
jax: 0.10.0
libtpu: 0.0.40
codegen_flags: <defaults>
</compile_context>

<pallas_src>
import functools

import jax
import jax.numpy as jnp
from jax.experimental import pallas as pl
from jax.experimental.pallas import tpu as pltpu


def _sim_residual_kernel(H, W, Cin, Cout,
                         xpad_ref, w1_ref, s1_ref, t1_ref,
                         w2_ref, b2_ref, s2_ref, t2_ref,
                         wd_ref, sd_ref, td_ref, pmat_ref,
                         o_ref, col1, hpad, col2):
    e_lambda = 1e-4
    f32 = jnp.float32
    kin = (W + 2) * Cin          # lane width of one padded input row
    kmid = (W + 2) * Cout        # lane width of one padded mid-activation row

    # ---- conv1: pack 3 row-shifted views -> ONE MXU matmul ------------------
    for k in range(3):
        col1[:, pl.ds(k * kin, kin)] = xpad_ref[pl.ds(k, H), :]
    acc1 = jnp.dot(col1[...].astype(jnp.bfloat16), w1_ref[...],
                   preferred_element_type=f32)                    # (H, W*Cout)

    # ---- bn1 (conv1 bias pre-folded into t1) + SiLU -------------------------
    h = acc1 * s1_ref[...] + t1_ref[...]
    h = h * jax.nn.sigmoid(h)

    # ---- conv2: stage h into a zero-bordered padded scratch, one matmul -----
    # Only the border is zeroed; the interior is fully rewritten every step.
    hpad[pl.ds(0, 1), :] = jnp.zeros((1, kmid), f32)
    hpad[pl.ds(H + 1, 1), :] = jnp.zeros((1, kmid), f32)
    hpad[:, pl.ds(0, Cout)] = jnp.zeros((H + 2, Cout), f32)
    hpad[:, pl.ds((W + 1) * Cout, Cout)] = jnp.zeros((H + 2, Cout), f32)
    hpad[pl.ds(1, H), pl.ds(Cout, W * Cout)] = h
    for k in range(3):
        col2[:, pl.ds(k * kmid, kmid)] = hpad[pl.ds(k, H), :]
    acc2 = jnp.dot(col2[...].astype(jnp.bfloat16), w2_ref[...],
                   preferred_element_type=f32)                    # (H, W*Cout)
    acc2 = acc2 + b2_ref[...]    # conv2 bias must be applied BEFORE SimAM

    # ---- SimAM attention (per-channel spatial statistics) -------------------
    # pmat = kron(ones(W,W), eye(Cout)) sums over the w-groups so channel
    # statistics stay in the lane-dense (1, W*Cout) layout (no reshapes).
    pmat = pmat_ref[...]
    hw = float(H * W)
    n = float(H * W - 1)
    mu = jnp.sum(jnp.dot(acc2, pmat, preferred_element_type=f32),
                 axis=0, keepdims=True) * (1.0 / hw)              # (1, W*Cout)
    d = (acc2 - mu) ** 2
    dsum = jnp.sum(jnp.dot(d, pmat, preferred_element_type=f32),
                   axis=0, keepdims=True)                         # (1, W*Cout)
    inv = pl.reciprocal(4.0 * (dsum * (1.0 / n) + e_lambda), approx=True)
    y = d * inv + 0.5
    out = acc2 * jax.nn.sigmoid(y)

    # ---- bn2 -----------------------------------------------------------------
    out = out * s2_ref[...] + t2_ref[...]

    # ---- downsample identity: 1x1 conv (block-diag weights) + bn ------------
    xid = xpad_ref[pl.ds(1, H), pl.ds(Cin, W * Cin)].astype(jnp.bfloat16)
    ident = jnp.dot(xid, wd_ref[...], preferred_element_type=f32)
    ident = ident * sd_ref[...] + td_ref[...]

    # ---- residual add + SiLU, lane-dense store -------------------------------
    out = out + ident
    out = out * jax.nn.sigmoid(out)
    o_ref[...] = out.astype(o_ref.dtype)


def _band_conv_weights(w, W):
    """(3,3,Cin,Cout) HWIO kernel -> (3*(W+2)*Cin, W*Cout) banded matmul matrix.

    Row-block dy multiplies padded-input row (h+dy) laid out lane-dense as
    (W+2)*Cin; columns are the lane-dense (W*Cout) output row.
    """
    blocks = []
    for dy in range(3):
        b = sum(jnp.kron(jnp.eye(W + 2, W, k=-dx, dtype=w.dtype), w[dy, dx])
                for dx in range(3))
        blocks.append(b)
    return jnp.concatenate(blocks, axis=0)


def sim_residual_block_pallas(x_nchw, p):
    B, Cin, H, W = x_nchw.shape
    Cout = p["w1"].shape[-1]

    # NHWC, zero-padded in the wrapper, flattened lane-dense per sample.
    x = jnp.transpose(x_nchw, (0, 2, 3, 1)).astype(jnp.float32)
    xpad = jnp.pad(x, ((0, 0), (1, 1), (1, 1), (0, 0)))
    xpad = xpad.reshape(B, H + 2, (W + 2) * Cin)

    # Pre-packed (bf16) weight matrices: one matmul per conv in the kernel.
    w1b = _band_conv_weights(p["w1"], W).astype(jnp.bfloat16)     # (3*(W+2)*Cin, W*Cout)
    w2b = _band_conv_weights(p["w2"], W).astype(jnp.bfloat16)     # (3*(W+2)*Cout, W*Cout)
    wdb = jnp.kron(jnp.eye(W, dtype=jnp.float32), p["wd"]).astype(jnp.bfloat16)

    def tile(v):  # per-channel (1, C) vector -> lane-dense (1, W*C)
        return jnp.tile(v.astype(jnp.float32), (1, W))

    s1 = tile(p["s1"]); t1 = tile(p["b1"] * p["s1"] + p["t1"])    # fold conv1 bias
    b2 = tile(p["b2"])                                            # NOT foldable (SimAM before bn2)
    s2 = tile(p["s2"]); t2 = tile(p["t2"])
    sd = tile(p["sd"]); td = tile(p["bd"] * p["sd"] + p["td"])    # fold 1x1 bias

    # Cross-w per-channel summation matrix for SimAM statistics.
    pmat = jnp.kron(jnp.ones((W, W), jnp.float32),
                    jnp.eye(Cout, dtype=jnp.float32))             # (W*Cout, W*Cout)

    kernel = functools.partial(_sim_residual_kernel, H, W, Cin, Cout)

    def full(shape):
        nd = len(shape)
        return pl.BlockSpec(shape, lambda b, nd=nd: (0,) * nd)

    out = pl.pallas_call(
        kernel,
        out_shape=jax.ShapeDtypeStruct((B, H, W * Cout), jnp.float32),
        grid=(B,),
        in_specs=[
            pl.BlockSpec((None, H + 2, (W + 2) * Cin), lambda b: (b, 0, 0)),
            full(w1b.shape), full(s1.shape), full(t1.shape),
            full(w2b.shape), full(b2.shape), full(s2.shape), full(t2.shape),
            full(wdb.shape), full(sd.shape), full(td.shape),
            full(pmat.shape),
        ],
        out_specs=pl.BlockSpec((None, H, W * Cout), lambda b: (b, 0, 0)),
        scratch_shapes=[
            pltpu.VMEM((H, 3 * (W + 2) * Cin), jnp.float32),      # conv1 patch matrix
            pltpu.VMEM((H + 2, (W + 2) * Cout), jnp.float32),     # zero-bordered conv2 input
            pltpu.VMEM((H, 3 * (W + 2) * Cout), jnp.float32),     # conv2 patch matrix
        ],
        compiler_params=pltpu.CompilerParams(
            dimension_semantics=("parallel",)),                   # v7x megacore
    )(xpad, w1b, s1, t1, w2b, b2, s2, t2, wdb, sd, td, pmat)

    return jnp.transpose(out.reshape(B, H, W, Cout), (0, 3, 1, 2))  # back to NCHW


def init_params(key, Cin, Cout):
    ks = jax.random.split(key, 9)

    def bn_fold(k, c, identity=False):
        if identity:
            return (jnp.ones((1, c), jnp.float32),
                    jnp.zeros((1, c), jnp.float32))
        k1, k2, k3, k4 = jax.random.split(k, 4)
        gamma = 1.0 + 0.1 * jax.random.normal(k1, (1, c))
        beta = 0.1 * jax.random.normal(k2, (1, c))
        mean = 0.1 * jax.random.normal(k3, (1, c))
        var = 1.0 + 0.1 * jnp.abs(jax.random.normal(k4, (1, c)))
        scale = gamma / jnp.sqrt(var + 1e-5)
        shift = beta - mean * scale
        return scale.astype(jnp.float32), shift.astype(jnp.float32)

    w1 = 0.1 * jax.random.normal(ks[0], (3, 3, Cin, Cout), jnp.float32)
    b1 = 0.1 * jax.random.normal(ks[1], (1, Cout), jnp.float32)
    w2 = 0.1 * jax.random.normal(ks[2], (3, 3, Cout, Cout), jnp.float32)
    b2 = 0.1 * jax.random.normal(ks[3], (1, Cout), jnp.float32)
    if Cin != Cout:
        wd = 0.1 * jax.random.normal(ks[4], (Cin, Cout), jnp.float32)
        bd = 0.1 * jax.random.normal(ks[5], (1, Cout), jnp.float32)
    else:
        wd = jnp.eye(Cin, dtype=jnp.float32)     # downsample is None -> identity
        bd = jnp.zeros((1, Cout), jnp.float32)
    s1, t1 = bn_fold(ks[6], Cout)
    s2, t2 = bn_fold(ks[7], Cout)
    sd, td = bn_fold(ks[8], Cout, identity=(Cin == Cout))
    return dict(w1=w1, b1=b1, s1=s1, t1=t1,
                w2=w2, b2=b2, s2=s2, t2=t2,
                wd=wd, bd=bd, sd=sd, td=td)


def ref_forward(x_nchw, p):
    """Pure-JAX reference (NHWC conv, bf16 matmul inputs / f32 accumulation)."""
    x = jnp.transpose(x_nchw, (0, 2, 3, 1)).astype(jnp.float32)
    bf = jnp.bfloat16

    def conv3(v, w, b):
        y = jax.lax.conv_general_dilated(
            v.astype(bf), w.astype(bf), window_strides=(1, 1), padding="SAME",
            dimension_numbers=("NHWC", "HWIO", "NHWC"),
            preferred_element_type=jnp.float32)
        return y + b.reshape(1, 1, 1, -1)

    out = conv3(x, p["w1"], p["b1"])
    out = out * p["s1"].reshape(1, 1, 1, -1) + p["t1"].reshape(1, 1, 1, -1)
    out = out * jax.nn.sigmoid(out)
    out = conv3(out, p["w2"], p["b2"])
    B, Hh, Ww, Cc = out.shape
    n = Hh * Ww - 1
    mu = out.mean(axis=(1, 2), keepdims=True)
    d = (out - mu) ** 2
    y = d / (4.0 * (d.sum(axis=(1, 2), keepdims=True) / n + 1e-4)) + 0.5
    out = out * jax.nn.sigmoid(y)
    out = out * p["s2"].reshape(1, 1, 1, -1) + p["t2"].reshape(1, 1, 1, -1)
    xf = x.astype(bf).reshape(B * Hh * Ww, -1)
    ident = jnp.dot(xf, p["wd"].astype(bf),
                    preferred_element_type=jnp.float32).reshape(B, Hh, Ww, -1)
    ident = ident + p["bd"].reshape(1, 1, 1, -1)
    ident = ident * p["sd"].reshape(1, 1, 1, -1) + p["td"].reshape(1, 1, 1, -1)
    out = out + ident
    out = out * jax.nn.sigmoid(out)
    return jnp.transpose(out, (0, 3, 1, 2))


if __name__ == "__main__":
    key = jax.random.PRNGKey(0)
    kx, kp = jax.random.split(key)
    B, Cin, Cout, H, W = 2, 4, 8, 16, 16         # small synthetic shapes
    x = jax.random.normal(kx, (B, Cin, H, W), jnp.float32)
    params = init_params(kp, Cin, Cout)

    y = sim_residual_block_pallas(x, params)
    y = jax.block_until_ready(y)

    y_ref = ref_forward(x, params)
    err = float(jnp.max(jnp.abs(y - y_ref)))
    # Tolerance accommodates bf16 MXU operands + approximate reciprocal in SimAM.
    assert jnp.allclose(y, y_ref, atol=1e-2, rtol=1e-2), f"max abs err {err}"
    print("KERNEL_OK")
</pallas_src>

<mosaic_0001>
module attributes {stable_mosaic.version = 11 : i64} {
  func.func @_sim_residual_kernel(%arg0: i32, %arg1: memref<1x18x72xf32, #tpu.memory_space<vmem>>, %arg2: memref<216x128xbf16, #tpu.memory_space<vmem>>, %arg3: memref<1x128xf32, #tpu.memory_space<vmem>>, %arg4: memref<1x128xf32, #tpu.memory_space<vmem>>, %arg5: memref<432x128xbf16, #tpu.memory_space<vmem>>, %arg6: memref<1x128xf32, #tpu.memory_space<vmem>>, %arg7: memref<1x128xf32, #tpu.memory_space<vmem>>, %arg8: memref<1x128xf32, #tpu.memory_space<vmem>>, %arg9: memref<64x128xbf16, #tpu.memory_space<vmem>>, %arg10: memref<1x128xf32, #tpu.memory_space<vmem>>, %arg11: memref<1x128xf32, #tpu.memory_space<vmem>>, %arg12: memref<128x128xf32, #tpu.memory_space<vmem>>, %arg13: memref<1x16x128xf32, #tpu.memory_space<vmem>>, %arg14: memref<16x216xf32, #tpu.memory_space<vmem>>, %arg15: memref<18x144xf32, #tpu.memory_space<vmem>>, %arg16: memref<16x432xf32, #tpu.memory_space<vmem>>) attributes {dimension_semantics = [#tpu.dimension_semantics<parallel>], iteration_bounds = array<i64: 2>, scalar_prefetch = 0 : i64, scratch_operands = 3 : i64, tpu.core_type = #tpu.core_type<tc>, window_params = [{transform_indices = @transform_0, window_bounds = array<i64: 1, 18, 72>}, {pipeline_mode = #tpu.pipeline_mode<synchronous>, transform_indices = @transform_1, window_bounds = array<i64: 216, 128>}, {pipeline_mode = #tpu.pipeline_mode<synchronous>, transform_indices = @transform_2, window_bounds = array<i64: 1, 128>}, {pipeline_mode = #tpu.pipeline_mode<synchronous>, transform_indices = @transform_3, window_bounds = array<i64: 1, 128>}, {pipeline_mode = #tpu.pipeline_mode<synchronous>, transform_indices = @transform_4, window_bounds = array<i64: 432, 128>}, {pipeline_mode = #tpu.pipeline_mode<synchronous>, transform_indices = @transform_5, window_bounds = array<i64: 1, 128>}, {pipeline_mode = #tpu.pipeline_mode<synchronous>, transform_indices = @transform_6, window_bounds = array<i64: 1, 128>}, {pipeline_mode = #tpu.pipeline_mode<synchronous>, transform_indices = @transform_7, window_bounds = array<i64: 1, 128>}, {pipeline_mode = #tpu.pipeline_mode<synchronous>, transform_indices = @transform_8, window_bounds = array<i64: 64, 128>}, {pipeline_mode = #tpu.pipeline_mode<synchronous>, transform_indices = @transform_9, window_bounds = array<i64: 1, 128>}, {pipeline_mode = #tpu.pipeline_mode<synchronous>, transform_indices = @transform_10, window_bounds = array<i64: 1, 128>}, {pipeline_mode = #tpu.pipeline_mode<synchronous>, transform_indices = @transform_11, window_bounds = array<i64: 128, 128>}, {transform_indices = @transform_12, window_bounds = array<i64: 1, 16, 128>}]} {
    %c0 = arith.constant 0 : index
    %c0_0 = arith.constant 0 : index
    %c0_1 = arith.constant 0 : index
    %0 = vector.load %arg1[%c0, %c0_0, %c0_1] : memref<1x18x72xf32, #tpu.memory_space<vmem>>, vector<1x16x72xf32>
    %1 = vector.shape_cast %0 : vector<1x16x72xf32> to vector<16x72xf32>
    %c0_2 = arith.constant 0 : index
    %c0_3 = arith.constant 0 : index
    %2 = vector.load %arg14[%c0_2, %c0_3] : memref<16x216xf32, #tpu.memory_space<vmem>>, vector<16x72xf32>
    tpu.vector_store %arg14[%c0_2, %c0_3], %1 {strides = array<i32>} : memref<16x216xf32, #tpu.memory_space<vmem>>, vector<16x72xf32>,
    %c0_4 = arith.constant 0 : index
    %c1 = arith.constant 1 : index
    %c0_5 = arith.constant 0 : index
    %3 = vector.load %arg1[%c0_4, %c1, %c0_5] : memref<1x18x72xf32, #tpu.memory_space<vmem>>, vector<1x16x72xf32>
    %4 = vector.shape_cast %3 : vector<1x16x72xf32> to vector<16x72xf32>
    %c0_6 = arith.constant 0 : index
    %c72 = arith.constant 72 : index
    %5 = vector.load %arg14[%c0_6, %c72] : memref<16x216xf32, #tpu.memory_space<vmem>>, vector<16x72xf32>
    tpu.vector_store %arg14[%c0_6, %c72], %4 {strides = array<i32>} : memref<16x216xf32, #tpu.memory_space<vmem>>, vector<16x72xf32>,
    %c0_7 = arith.constant 0 : index
    %c2 = arith.constant 2 : index
    %c0_8 = arith.constant 0 : index
    %6 = vector.load %arg1[%c0_7, %c2, %c0_8] : memref<1x18x72xf32, #tpu.memory_space<vmem>>, vector<1x16x72xf32>
    %7 = vector.shape_cast %6 : vector<1x16x72xf32> to vector<16x72xf32>
    %c0_9 = arith.constant 0 : index
    %c144 = arith.constant 144 : index
    %8 = vector.load %arg14[%c0_9, %c144] : memref<16x216xf32, #tpu.memory_space<vmem>>, vector<16x72xf32>
    tpu.vector_store %arg14[%c0_9, %c144], %7 {strides = array<i32>} : memref<16x216xf32, #tpu.memory_space<vmem>>, vector<16x72xf32>,
    %c0_10 = arith.constant 0 : index
    %c0_11 = arith.constant 0 : index
    %9 = vector.load %arg14[%c0_10, %c0_11] : memref<16x216xf32, #tpu.memory_space<vmem>>, vector<16x216xf32>
    %10 = arith.truncf %9 : vector<16x216xf32> to vector<16x216xbf16>
    %c0_12 = arith.constant 0 : index
    %c0_13 = arith.constant 0 : index
    %11 = vector.load %arg2[%c0_12, %c0_13] : memref<216x128xbf16, #tpu.memory_space<vmem>>, vector<216x128xbf16>
    %cst = arith.constant dense<0.000000e+00> : vector<16x128xf32>
    %12 = tpu.matmul %10, %11, %cst {dimension_numbers = #tpu.dot_dimension_numbers<[1], [0], [0], [1], [0, 0, 1, 1], [], []>} : vector<16x216xbf16>, vector<216x128xbf16>, vector<16x128xf32> -> vector<16x128xf32>
    %c0_14 = arith.constant 0 : index
    %c0_15 = arith.constant 0 : index
    %13 = vector.load %arg3[%c0_14, %c0_15] : memref<1x128xf32, #tpu.memory_space<vmem>>, vector<1x128xf32>
    %14 = vector.broadcast %13 : vector<1x128xf32> to vector<16x128xf32>
    %15 = arith.mulf %12, %14 : vector<16x128xf32>
    %c0_16 = arith.constant 0 : index
    %c0_17 = arith.constant 0 : index
    %16 = vector.load %arg4[%c0_16, %c0_17] : memref<1x128xf32, #tpu.memory_space<vmem>>, vector<1x128xf32>
    %17 = vector.broadcast %16 : vector<1x128xf32> to vector<16x128xf32>
    %18 = arith.addf %15, %17 : vector<16x128xf32>
    %19 = arith.negf %18 : vector<16x128xf32>
    %20 = math.exp %19 : vector<16x128xf32>
    %cst_18 = arith.constant 1.000000e+00 : f32
    %21 = vector.broadcast %cst_18 : f32 to vector<16x128xf32>
    %22 = arith.addf %21, %20 : vector<16x128xf32>
    %23 = arith.divf %21, %22 : vector<16x128xf32>
    %24 = arith.mulf %18, %23 : vector<16x128xf32>
    %cst_19 = arith.constant 0.000000e+00 : f32
    %25 = vector.broadcast %cst_19 : f32 to vector<1x144xf32>
    %c0_20 = arith.constant 0 : index
    %c0_21 = arith.constant 0 : index
    %26 = vector.load %arg15[%c0_20, %c0_21] : memref<18x144xf32, #tpu.memory_space<vmem>>, vector<1x144xf32>
    tpu.vector_store %arg15[%c0_20, %c0_21], %25 {strides = array<i32>} : memref<18x144xf32, #tpu.memory_space<vmem>>, vector<1x144xf32>,
    %cst_22 = arith.constant 0.000000e+00 : f32
    %27 = vector.broadcast %cst_22 : f32 to vector<1x144xf32>
    %c17 = arith.constant 17 : index
    %c0_23 = arith.constant 0 : index
    %28 = vector.load %arg15[%c17, %c0_23] : memref<18x144xf32, #tpu.memory_space<vmem>>, vector<1x144xf32>
    tpu.vector_store %arg15[%c17, %c0_23], %27 {strides = array<i32>} : memref<18x144xf32, #tpu.memory_space<vmem>>, vector<1x144xf32>,
    %cst_24 = arith.constant 0.000000e+00 : f32
    %29 = vector.broadcast %cst_24 : f32 to vector<18x8xf32>
    %c0_25 = arith.constant 0 : index
    %c0_26 = arith.constant 0 : index
    %30 = vector.load %arg15[%c0_25, %c0_26] : memref<18x144xf32, #tpu.memory_space<vmem>>, vector<18x8xf32>
    tpu.vector_store %arg15[%c0_25, %c0_26], %29 {strides = array<i32>} : memref<18x144xf32, #tpu.memory_space<vmem>>, vector<18x8xf32>,
    %cst_27 = arith.constant 0.000000e+00 : f32
    %31 = vector.broadcast %cst_27 : f32 to vector<18x8xf32>
    %c0_28 = arith.constant 0 : index
    %c136 = arith.constant 136 : index
    %32 = vector.load %arg15[%c0_28, %c136] : memref<18x144xf32, #tpu.memory_space<vmem>>, vector<18x8xf32>
    tpu.vector_store %arg15[%c0_28, %c136], %31 {strides = array<i32>} : memref<18x144xf32, #tpu.memory_space<vmem>>, vector<18x8xf32>,
    %c1_29 = arith.constant 1 : index
    %c8 = arith.constant 8 : index
    %33 = vector.load %arg15[%c1_29, %c8] : memref<18x144xf32, #tpu.memory_space<vmem>>, vector<16x128xf32>
    tpu.vector_store %arg15[%c1_29, %c8], %24 {strides = array<i32>} : memref<18x144xf32, #tpu.memory_space<vmem>>, vector<16x128xf32>,
    %c0_30 = arith.constant 0 : index
    %c0_31 = arith.constant 0 : index
    %34 = vector.load %arg15[%c0_30, %c0_31] : memref<18x144xf32, #tpu.memory_space<vmem>>, vector<16x144xf32>
    %c0_32 = arith.constant 0 : index
    %c0_33 = arith.constant 0 : index
    %35 = vector.load %arg16[%c0_32, %c0_33] : memref<16x432xf32, #tpu.memory_space<vmem>>, vector<16x144xf32>
    tpu.vector_store %arg16[%c0_32, %c0_33], %34 {strides = array<i32>} : memref<16x432xf32, #tpu.memory_space<vmem>>, vector<16x144xf32>,
    %c1_34 = arith.constant 1 : index
    %c0_35 = arith.constant 0 : index
    %36 = vector.load %arg15[%c1_34, %c0_35] : memref<18x144xf32, #tpu.memory_space<vmem>>, vector<16x144xf32>
    %c0_36 = arith.constant 0 : index
    %c144_37 = arith.constant 144 : index
    %37 = vector.load %arg16[%c0_36, %c144_37] : memref<16x432xf32, #tpu.memory_space<vmem>>, vector<16x144xf32>
    tpu.vector_store %arg16[%c0_36, %c144_37], %36 {strides = array<i32>} : memref<16x432xf32, #tpu.memory_space<vmem>>, vector<16x144xf32>,
    %c2_38 = arith.constant 2 : index
    %c0_39 = arith.constant 0 : index
    %38 = vector.load %arg15[%c2_38, %c0_39] : memref<18x144xf32, #tpu.memory_space<vmem>>, vector<16x144xf32>
    %c0_40 = arith.constant 0 : index
    %c288 = arith.constant 288 : index
    %39 = vector.load %arg16[%c0_40, %c288] : memref<16x432xf32, #tpu.memory_space<vmem>>, vector<16x144xf32>
    tpu.vector_store %arg16[%c0_40, %c288], %38 {strides = array<i32>} : memref<16x432xf32, #tpu.memory_space<vmem>>, vector<16x144xf32>,
    %c0_41 = arith.constant 0 : index
    %c0_42 = arith.constant 0 : index
    %40 = vector.load %arg16[%c0_41, %c0_42] : memref<16x432xf32, #tpu.memory_space<vmem>>, vector<16x432xf32>
    %41 = arith.truncf %40 : vector<16x432xf32> to vector<16x432xbf16>
    %c0_43 = arith.constant 0 : index
    %c0_44 = arith.constant 0 : index
    %42 = vector.load %arg5[%c0_43, %c0_44] : memref<432x128xbf16, #tpu.memory_space<vmem>>, vector<432x128xbf16>
    %cst_45 = arith.constant dense<0.000000e+00> : vector<16x128xf32>
    %43 = tpu.matmul %41, %42, %cst_45 {dimension_numbers = #tpu.dot_dimension_numbers<[1], [0], [0], [1], [0, 0, 1, 1], [], []>} : vector<16x432xbf16>, vector<432x128xbf16>, vector<16x128xf32> -> vector<16x128xf32>
    %c0_46 = arith.constant 0 : index
    %c0_47 = arith.constant 0 : index
    %44 = vector.load %arg6[%c0_46, %c0_47] : memref<1x128xf32, #tpu.memory_space<vmem>>, vector<1x128xf32>
    %45 = vector.broadcast %44 : vector<1x128xf32> to vector<16x128xf32>
    %46 = arith.addf %43, %45 : vector<16x128xf32>
    %c0_48 = arith.constant 0 : index
    %c0_49 = arith.constant 0 : index
    %47 = vector.load %arg12[%c0_48, %c0_49] : memref<128x128xf32, #tpu.memory_space<vmem>>, vector<128x128xf32>
    %cst_50 = arith.constant dense<0.000000e+00> : vector<16x128xf32>
    %48 = tpu.matmul %46, %47, %cst_50 {dimension_numbers = #tpu.dot_dimension_numbers<[1], [0], [0], [1], [0, 0, 1, 1], [], []>} : vector<16x128xf32>, vector<128x128xf32>, vector<16x128xf32> -> vector<16x128xf32>
    %cst_51 = arith.constant dense<0.000000e+00> : vector<128xf32>
    %49 = vector.multi_reduction <add>, %48, %cst_51 [0] : vector<16x128xf32> to vector<128xf32>
    %50 = vector.shape_cast %49 : vector<128xf32> to vector<1x128xf32>
    %cst_52 = arith.constant 3.906250e-03 : f32
    %51 = vector.broadcast %cst_52 : f32 to vector<1x128xf32>
    %52 = arith.mulf %50, %51 : vector<1x128xf32>
    %53 = vector.broadcast %52 : vector<1x128xf32> to vector<16x128xf32>
    %54 = arith.subf %46, %53 : vector<16x128xf32>
    %55 = arith.mulf %54, %54 : vector<16x128xf32>
    %cst_53 = arith.constant dense<0.000000e+00> : vector<16x128xf32>
    %56 = tpu.matmul %55, %47, %cst_53 {dimension_numbers = #tpu.dot_dimension_numbers<[1], [0], [0], [1], [0, 0, 1, 1], [], []>} : vector<16x128xf32>, vector<128x128xf32>, vector<16x128xf32> -> vector<16x128xf32>
    %cst_54 = arith.constant dense<0.000000e+00> : vector<128xf32>
    %57 = vector.multi_reduction <add>, %56, %cst_54 [0] : vector<16x128xf32> to vector<128xf32>
    %58 = vector.shape_cast %57 : vector<128xf32> to vector<1x128xf32>
    %cst_55 = arith.constant 0.00392156886 : f32
    %59 = vector.broadcast %cst_55 : f32 to vector<1x128xf32>
    %60 = arith.mulf %58, %59 : vector<1x128xf32>
    %cst_56 = arith.constant 9.99999974E-5 : f32
    %61 = vector.broadcast %cst_56 : f32 to vector<1x128xf32>
    %62 = arith.addf %60, %61 : vector<1x128xf32>
    %cst_57 = arith.constant 4.000000e+00 : f32
    %63 = vector.broadcast %cst_57 : f32 to vector<1x128xf32>
    %64 = arith.mulf %63, %62 : vector<1x128xf32>
    %65 = tpu.reciprocal %64 {approx = true} : vector<1x128xf32> -> vector<1x128xf32>
    %66 = vector.broadcast %65 : vector<1x128xf32> to vector<16x128xf32>
    %67 = arith.mulf %55, %66 : vector<16x128xf32>
    %cst_58 = arith.constant 5.000000e-01 : f32
    %68 = vector.broadcast %cst_58 : f32 to vector<16x128xf32>
    %69 = arith.addf %67, %68 : vector<16x128xf32>
    %70 = arith.negf %69 : vector<16x128xf32>
    %71 = math.exp %70 : vector<16x128xf32>
    %cst_59 = arith.constant 1.000000e+00 : f32
    %72 = vector.broadcast %cst_59 : f32 to vector<16x128xf32>
    %73 = arith.addf %72, %71 : vector<16x128xf32>
    %74 = arith.divf %72, %73 : vector<16x128xf32>
    %75 = arith.mulf %46, %74 : vector<16x128xf32>
    %c0_60 = arith.constant 0 : index
    %c0_61 = arith.constant 0 : index
    %76 = vector.load %arg7[%c0_60, %c0_61] : memref<1x128xf32, #tpu.memory_space<vmem>>, vector<1x128xf32>
    %77 = vector.broadcast %76 : vector<1x128xf32> to vector<16x128xf32>
    %78 = arith.mulf %75, %77 : vector<16x128xf32>
    %c0_62 = arith.constant 0 : index
    %c0_63 = arith.constant 0 : index
    %79 = vector.load %arg8[%c0_62, %c0_63] : memref<1x128xf32, #tpu.memory_space<vmem>>, vector<1x128xf32>
    %80 = vector.broadcast %79 : vector<1x128xf32> to vector<16x128xf32>
    %81 = arith.addf %78, %80 : vector<16x128xf32>
    %c0_64 = arith.constant 0 : index
    %c1_65 = arith.constant 1 : index
    %c4 = arith.constant 4 : index
    %82 = vector.load %arg1[%c0_64, %c1_65, %c4] : memref<1x18x72xf32, #tpu.memory_space<vmem>>, vector<1x16x64xf32>
    %83 = vector.shape_cast %82 : vector<1x16x64xf32> to vector<16x64xf32>
    %84 = arith.truncf %83 : vector<16x64xf32> to vector<16x64xbf16>
    %c0_66 = arith.constant 0 : index
    %c0_67 = arith.constant 0 : index
    %85 = vector.load %arg9[%c0_66, %c0_67] : memref<64x128xbf16, #tpu.memory_space<vmem>>, vector<64x128xbf16>
    %cst_68 = arith.constant dense<0.000000e+00> : vector<16x128xf32>
    %86 = tpu.matmul %84, %85, %cst_68 {dimension_numbers = #tpu.dot_dimension_numbers<[1], [0], [0], [1], [0, 0, 1, 1], [], []>} : vector<16x64xbf16>, vector<64x128xbf16>, vector<16x128xf32> -> vector<16x128xf32>
    %c0_69 = arith.constant 0 : index
    %c0_70 = arith.constant 0 : index
    %87 = vector.load %arg10[%c0_69, %c0_70] : memref<1x128xf32, #tpu.memory_space<vmem>>, vector<1x128xf32>
    %88 = vector.broadcast %87 : vector<1x128xf32> to vector<16x128xf32>
    %89 = arith.mulf %86, %88 : vector<16x128xf32>
    %c0_71 = arith.constant 0 : index
    %c0_72 = arith.constant 0 : index
    %90 = vector.load %arg11[%c0_71, %c0_72] : memref<1x128xf32, #tpu.memory_space<vmem>>, vector<1x128xf32>
    %91 = vector.broadcast %90 : vector<1x128xf32> to vector<16x128xf32>
    %92 = arith.addf %89, %91 : vector<16x128xf32>
    %93 = arith.addf %81, %92 : vector<16x128xf32>
    %94 = arith.negf %93 : vector<16x128xf32>
    %95 = math.exp %94 : vector<16x128xf32>
    %cst_73 = arith.constant 1.000000e+00 : f32
    %96 = vector.broadcast %cst_73 : f32 to vector<16x128xf32>
    %97 = arith.addf %96, %95 : vector<16x128xf32>
    %98 = arith.divf %96, %97 : vector<16x128xf32>
    %99 = arith.mulf %93, %98 : vector<16x128xf32>
    %c0_74 = arith.constant 0 : index
    %c0_75 = arith.constant 0 : index
    %c0_76 = arith.constant 0 : index
    %100 = vector.load %arg13[%c0_74, %c0_75, %c0_76] : memref<1x16x128xf32, #tpu.memory_space<vmem>>, vector<1x16x128xf32>
    %101 = vector.shape_cast %100 : vector<1x16x128xf32> to vector<16x128xf32>
    %102 = vector.shape_cast %99 : vector<16x128xf32> to vector<1x16x128xf32>
    tpu.vector_store %arg13[%c0_74, %c0_75, %c0_76], %102 {strides = array<i32>} : memref<1x16x128xf32, #tpu.memory_space<vmem>>, vector<1x16x128xf32>,
    return
  }
  func.func @transform_0(%arg0: i32) -> (i32, i32, i32) {
    %c0_i32 = arith.constant 0 : i32
    %c0_i32_0 = arith.constant 0 : i32
    %c0_i32_1 = arith.constant 0 : i32
    return %arg0, %c0_i32, %c0_i32_0 : i32, i32, i32
  }
  func.func @transform_1(%arg0: i32) -> (i32, i32) {
    %c0_i32 = arith.constant 0 : i32
    %c0_i32_0 = arith.constant 0 : i32
    %c0_i32_1 = arith.constant 0 : i32
    return %c0_i32, %c0_i32_0 : i32, i32
  }
  func.func @transform_2(%arg0: i32) -> (i32, i32) {
    %c0_i32 = arith.constant 0 : i32
    %c0_i32_0 = arith.constant 0 : i32
    %c0_i32_1 = arith.constant 0 : i32
    return %c0_i32, %c0_i32_0 : i32, i32
  }
  func.func @transform_3(%arg0: i32) -> (i32, i32) {
    %c0_i32 = arith.constant 0 : i32
    %c0_i32_0 = arith.constant 0 : i32
    %c0_i32_1 = arith.constant 0 : i32
    return %c0_i32, %c0_i32_0 : i32, i32
  }
  func.func @transform_4(%arg0: i32) -> (i32, i32) {
    %c0_i32 = arith.constant 0 : i32
    %c0_i32_0 = arith.constant 0 : i32
    %c0_i32_1 = arith.constant 0 : i32
    return %c0_i32, %c0_i32_0 : i32, i32
  }
  func.func @transform_5(%arg0: i32) -> (i32, i32) {
    %c0_i32 = arith.constant 0 : i32
    %c0_i32_0 = arith.constant 0 : i32
    %c0_i32_1 = arith.constant 0 : i32
    return %c0_i32, %c0_i32_0 : i32, i32
  }
  func.func @transform_6(%arg0: i32) -> (i32, i32) {
    %c0_i32 = arith.constant 0 : i32
    %c0_i32_0 = arith.constant 0 : i32
    %c0_i32_1 = arith.constant 0 : i32
    return %c0_i32, %c0_i32_0 : i32, i32
  }
  func.func @transform_7(%arg0: i32) -> (i32, i32) {
    %c0_i32 = arith.constant 0 : i32
    %c0_i32_0 = arith.constant 0 : i32
    %c0_i32_1 = arith.constant 0 : i32
    return %c0_i32, %c0_i32_0 : i32, i32
  }
  func.func @transform_8(%arg0: i32) -> (i32, i32) {
    %c0_i32 = arith.constant 0 : i32
    %c0_i32_0 = arith.constant 0 : i32
    %c0_i32_1 = arith.constant 0 : i32
    return %c0_i32, %c0_i32_0 : i32, i32
  }
  func.func @transform_9(%arg0: i32) -> (i32, i32) {
    %c0_i32 = arith.constant 0 : i32
    %c0_i32_0 = arith.constant 0 : i32
    %c0_i32_1 = arith.constant 0 : i32
    return %c0_i32, %c0_i32_0 : i32, i32
  }
  func.func @transform_10(%arg0: i32) -> (i32, i32) {
    %c0_i32 = arith.constant 0 : i32
    %c0_i32_0 = arith.constant 0 : i32
    %c0_i32_1 = arith.constant 0 : i32
    return %c0_i32, %c0_i32_0 : i32, i32
  }
  func.func @transform_11(%arg0: i32) -> (i32, i32) {
    %c0_i32 = arith.constant 0 : i32
    %c0_i32_0 = arith.constant 0 : i32
    %c0_i32_1 = arith.constant 0 : i32
    return %c0_i32, %c0_i32_0 : i32, i32
  }
  func.func @transform_12(%arg0: i32) -> (i32, i32, i32) {
    %c0_i32 = arith.constant 0 : i32
    %c0_i32_0 = arith.constant 0 : i32
    %c0_i32_1 = arith.constant 0 : i32
    return %arg0, %c0_i32, %c0_i32_0 : i32, i32, i32
  }
}

</mosaic_0001>

<llo_original>
// kernel: tpu_custom_call.1
$region0: #{tpu_custom_call.1}
  #allocation0 [shape = 'u32[]', space=smem, size = 0x4, offset = 0x4, fixed_abs, tag = 'smem constant byte address 0x4 - core index']
  #allocation1 [shape = 'u32[72,128]{1,0:T(1,128)}', space=vmem, size = 0x9000, scoped, tag = 'internal scratch']
  #allocation2 [shape = 'f32[16,216]{1,0:T(8,128)}', space=vmem, size = 0x4000, scoped, tag = 'scratch operand']
  #allocation3 [shape = 'f32[18,144]{1,0:T(8,128)}', space=vmem, size = 0x6000, scoped, tag = 'scratch operand']
  #allocation4 [shape = 'f32[16,432]{1,0:T(8,128)}', space=vmem, size = 0x8000, scoped, tag = 'scratch operand']
  %s0 = inlined_call_operand.vmem [shape: f32[2,18,72], index: 0, kind: input, shape index: {}]
  %s1 = inlined_call_operand.hbm [shape: bf16[216,128], index: 1, kind: input, shape index: {}]
  %s2 = inlined_call_operand.vmem [shape: f32[1,128], index: 2, kind: input, shape index: {}]
  %s3 = inlined_call_operand.vmem [shape: f32[1,128], index: 3, kind: input, shape index: {}]
  %s4 = inlined_call_operand.hbm [shape: bf16[432,128], index: 4, kind: input, shape index: {}]
  %s5 = inlined_call_operand.vmem [shape: f32[1,128], index: 5, kind: input, shape index: {}]
  %s6 = inlined_call_operand.vmem [shape: f32[1,128], index: 6, kind: input, shape index: {}]
  %s7 = inlined_call_operand.vmem [shape: f32[1,128], index: 7, kind: input, shape index: {}]
  %s8 = inlined_call_operand.vmem [shape: bf16[64,128], index: 8, kind: input, shape index: {}]
  %s9 = inlined_call_operand.vmem [shape: f32[1,128], index: 9, kind: input, shape index: {}]
  %s10 = inlined_call_operand.vmem [shape: f32[1,128], index: 10, kind: input, shape index: {}]
  %s11 = inlined_call_operand.hbm [shape: f32[128,128], index: 11, kind: input, shape index: {}]
  %s12 = inlined_call_operand.hbm [shape: f32[2,16,128], index: 12, kind: output, shape index: {}]
  %s13 = sld [smem:[#allocation0]]
  $region93: #{tpu_custom_call.1} parent=0
    _
  %s15 = ssub.s32 1, %s13
  %s16 = scalar_select 0, %s15, %s13
  $region1: #{tpu_custom_call.1} parent=0
    #allocation5 [shape = 'u8[55296]{0}', space=vmem, size = 0xd800, scoped, tag = 'input window, operand 1, single buffered']
    #allocation6 [shape = 's32[2]{0}', space=sflag, size = 0x8, scoped, tag = 'scoped memory for tpu_custom_call.1']
    #allocation7 [shape = 's32[2]{0}', space=sflag, size = 0x8, scoped, tag = 'scoped memory for tpu_custom_call.1']
    #allocation8 [shape = 'u8[110592]{0}', space=vmem, size = 0x1b000, scoped, tag = 'input window, operand 4, single buffered']
    #allocation9 [shape = 's32[1]{0}', space=sflag, size = 0x4, scoped, tag = 'scoped memory for tpu_custom_call.1']
    #allocation10 [shape = 'u8[65536]{0}', space=vmem, size = 0x10000, scoped, tag = 'input window, operand 11, single buffered']
    #allocation11 [shape = 'u8[16384]{0}', space=vmem, size = 0x4000, scoped, tag = 'output window, operand 0']
    %17 = vsyncpa [#allocation6], 0
    %18 = vsyncpa [#allocation9], 0
    %19 = vsyncpa [#allocation7], 0
    %s20 = scalar_lea.sflag [#allocation7], 1
    %21 = vsyncpa %s20, 0
    loop: start=0, step=1, limit=4
    $region2: #{tpu_custom_call.1} parent=1 // loop_pre_header
      _
    $region3: #{tpu_custom_call.1} parent=1 // loop_header
      %s23 = sphi 0, %s27
      %p24 = scmp.ge.s32.totalorder %s23, 4
      %s33 = sphi 0, %s35
      %s36 = sphi 0, %s33
      %s37 = sphi 0, %s36
      %s53 = sphi 0, %s37
      %s57 = sphi 0, %s57
      %s59 = sphi 0, %s57
      %s60 = sphi 0, %s59
      %s74 = sphi 0, %s60
      %s78 = sphi 0, %s78
      %s80 = sphi 0, %s78
      %s81 = sphi 0, %s80
      %s95 = sphi 0, %s81
      %s99 = sphi 0, %s99
      %s101 = sphi 0, %s99
      %s102 = sphi 0, %s101
      %s116 = sphi 0, %s102
      %s120 = sphi 0, %s120
      %s122 = sphi 0, %s120
      %s123 = sphi 0, %s122
      %s137 = sphi 0, %s123
      %s141 = sphi 0, %s141
      %s143 = sphi 0, %s141
      %s144 = sphi 0, %s143
      %s158 = sphi 0, %s144
      %s162 = sphi 0, %s162
      %s164 = sphi 0, %s162
      %s165 = sphi 0, %s164
      %s179 = sphi 0, %s165
      %s183 = sphi 0, %s183
      %s185 = sphi 0, %s183
      %s186 = sphi 0, %s185
      %s200 = sphi 0, %s186
      %s204 = sphi 0, %s204
      %s206 = sphi 0, %s204
      %s207 = sphi 0, %s206
      %s221 = sphi 0, %s207
      %s225 = sphi 0, %s225
      %s227 = sphi 0, %s225
      %s228 = sphi 0, %s227
      %s242 = sphi 0, %s228
      %s246 = sphi 0, %s246
      %s248 = sphi 0, %s246
      %s249 = sphi 0, %s248
      %s263 = sphi 0, %s249
      %s267 = sphi 0, %s267
      %s269 = sphi 0, %s267
      %s270 = sphi 0, %s269
      %s284 = sphi 0, %s270
      %s290 = sphi 0, %s292
      %s293 = sphi 0, %s290
      %s294 = sphi 0, %s293
      %s310 = sphi 0, %s294
    $region4: #{tpu_custom_call.1} parent=1 // loop_header_branch
      %26 = sbr.rel (%p24) target = $region8
    $region5: #{tpu_custom_call.1} parent=1 // loop_body
      %s28 = ssub.s32 %s23, 1
      %s29 = ssub.s32 %s23, 2
      %s30 = sadd.s32 %s23, 1
      %s31 = ssub.s32 %s23, %s30
      %p32 = scmp.eq.s32.totalorder %s31, 0
      %s34 = sadd.s32 %s33, 1
      %s35 = scalar_select %p32, %s33, %s34
      %p38 = pneg %p32
      %p39 = scmp.eq.s32.totalorder %s23, 1
      %p40 = por %p38, %p39
      %p41 = scmp.ne.s32.totalorder %s33, %s36
      %p42 = scmp.eq.s32.totalorder %s23, 0
      %p43 = por %p41, %p42
      %p44 = scmp.ne.s32.totalorder %s33, %s36
      %p45 = scmp.eq.s32.totalorder %s28, 1
      %p46 = por %p44, %p45
      %p47 = scmp.ne.s32.totalorder %s36, %s37
      %p48 = scmp.eq.s32.totalorder %s28, 0
      %p49 = por %p47, %p48
      %p50 = scmp.ne.s32.totalorder %s36, %s37
      %p51 = scmp.eq.s32.totalorder %s29, 1
      %p52 = por %p50, %p51
      %p54 = scmp.ne.s32.totalorder %s37, %s53
      %p55 = scmp.eq.s32.totalorder %s29, 0
      %p56 = por %p54, %p55
      %s58 = sadd.s32 %s57, 1
      %p61 = scmp.eq.s32.totalorder %s23, 1
      %p62 = scmp.ne.s32.totalorder %s57, %s59
      %p63 = scmp.eq.s32.totalorder %s23, 0
      %p64 = por %p62, %p63
      %p65 = scmp.ne.s32.totalorder %s57, %s59
      %p66 = scmp.eq.s32.totalorder %s28, 1
      %p67 = por %p65, %p66
      %p68 = scmp.ne.s32.totalorder %s59, %s60
      %p69 = scmp.eq.s32.totalorder %s28, 0
      %p70 = por %p68, %p69
      %p71 = scmp.ne.s32.totalorder %s59, %s60
      %p72 = scmp.eq.s32.totalorder %s29, 1
      %p73 = por %p71, %p72
      %p75 = scmp.ne.s32.totalorder %s60, %s74
      %p76 = scmp.eq.s32.totalorder %s29, 0
      %p77 = por %p75, %p76
      %s79 = sadd.s32 %s78, 1
      %p82 = scmp.eq.s32.totalorder %s23, 1
      %p83 = scmp.ne.s32.totalorder %s78, %s80
      %p84 = scmp.eq.s32.totalorder %s23, 0
      %p85 = por %p83, %p84
      %p86 = scmp.ne.s32.totalorder %s78, %s80
      %p87 = scmp.eq.s32.totalorder %s28, 1
      %p88 = por %p86, %p87
      %p89 = scmp.ne.s32.totalorder %s80, %s81
      %p90 = scmp.eq.s32.totalorder %s28, 0
      %p91 = por %p89, %p90
      %p92 = scmp.ne.s32.totalorder %s80, %s81
      %p93 = scmp.eq.s32.totalorder %s29, 1
      %p94 = por %p92, %p93
      %p96 = scmp.ne.s32.totalorder %s81, %s95
      %p97 = scmp.eq.s32.totalorder %s29, 0
      %p98 = por %p96, %p97
      %s100 = sadd.s32 %s99, 1
      %p103 = scmp.eq.s32.totalorder %s23, 1
      %p104 = scmp.ne.s32.totalorder %s99, %s101
      %p105 = scmp.eq.s32.totalorder %s23, 0
      %p106 = por %p104, %p105
      %p107 = scmp.ne.s32.totalorder %s99, %s101
      %p108 = scmp.eq.s32.totalorder %s28, 1
      %p109 = por %p107, %p108
      %p110 = scmp.ne.s32.totalorder %s101, %s102
      %p111 = scmp.eq.s32.totalorder %s28, 0
      %p112 = por %p110, %p111
      %p113 = scmp.ne.s32.totalorder %s101, %s102
      %p114 = scmp.eq.s32.totalorder %s29, 1
      %p115 = por %p113, %p114
      %p117 = scmp.ne.s32.totalorder %s102, %s116
      %p118 = scmp.eq.s32.totalorder %s29, 0
      %p119 = por %p117, %p118
      %s121 = sadd.s32 %s120, 1
      %p124 = scmp.eq.s32.totalorder %s23, 1
      %p125 = scmp.ne.s32.totalorder %s120, %s122
      %p126 = scmp.eq.s32.totalorder %s23, 0
      %p127 = por %p125, %p126
      %p128 = scmp.ne.s32.totalorder %s120, %s122
      %p129 = scmp.eq.s32.totalorder %s28, 1
      %p130 = por %p128, %p129
      %p131 = scmp.ne.s32.totalorder %s122, %s123
      %p132 = scmp.eq.s32.totalorder %s28, 0
      %p133 = por %p131, %p132
      %p134 = scmp.ne.s32.totalorder %s122, %s123
      %p135 = scmp.eq.s32.totalorder %s29, 1
      %p136 = por %p134, %p135
      %p138 = scmp.ne.s32.totalorder %s123, %s137
      %p139 = scmp.eq.s32.totalorder %s29, 0
      %p140 = por %p138, %p139
      %s142 = sadd.s32 %s141, 1
      %p145 = scmp.eq.s32.totalorder %s23, 1
      %p146 = scmp.ne.s32.totalorder %s141, %s143
      %p147 = scmp.eq.s32.totalorder %s23, 0
      %p148 = por %p146, %p147
      %p149 = scmp.ne.s32.totalorder %s141, %s143
      %p150 = scmp.eq.s32.totalorder %s28, 1
      %p151 = por %p149, %p150
      %p152 = scmp.ne.s32.totalorder %s143, %s144
      %p153 = scmp.eq.s32.totalorder %s28, 0
      %p154 = por %p152, %p153
      %p155 = scmp.ne.s32.totalorder %s143, %s144
      %p156 = scmp.eq.s32.totalorder %s29, 1
      %p157 = por %p155, %p156
      %p159 = scmp.ne.s32.totalorder %s144, %s158
      %p160 = scmp.eq.s32.totalorder %s29, 0
      %p161 = por %p159, %p160
      %s163 = sadd.s32 %s162, 1
      %p166 = scmp.eq.s32.totalorder %s23, 1
      %p167 = scmp.ne.s32.totalorder %s162, %s164
      %p168 = scmp.eq.s32.totalorder %s23, 0
      %p169 = por %p167, %p168
      %p170 = scmp.ne.s32.totalorder %s162, %s164
      %p171 = scmp.eq.s32.totalorder %s28, 1
      %p172 = por %p170, %p171
      %p173 = scmp.ne.s32.totalorder %s164, %s165
      %p174 = scmp.eq.s32.totalorder %s28, 0
      %p175 = por %p173, %p174
      %p176 = scmp.ne.s32.totalorder %s164, %s165
      %p177 = scmp.eq.s32.totalorder %s29, 1
      %p178 = por %p176, %p177
      %p180 = scmp.ne.s32.totalorder %s165, %s179
      %p181 = scmp.eq.s32.totalorder %s29, 0
      %p182 = por %p180, %p181
      %s184 = sadd.s32 %s183, 1
      %p187 = scmp.eq.s32.totalorder %s23, 1
      %p188 = scmp.ne.s32.totalorder %s183, %s185
      %p189 = scmp.eq.s32.totalorder %s23, 0
      %p190 = por %p188, %p189
      %p191 = scmp.ne.s32.totalorder %s183, %s185
      %p192 = scmp.eq.s32.totalorder %s28, 1
      %p193 = por %p191, %p192
      %p194 = scmp.ne.s32.totalorder %s185, %s186
      %p195 = scmp.eq.s32.totalorder %s28, 0
      %p196 = por %p194, %p195
      %p197 = scmp.ne.s32.totalorder %s185, %s186
      %p198 = scmp.eq.s32.totalorder %s29, 1
      %p199 = por %p197, %p198
      %p201 = scmp.ne.s32.totalorder %s186, %s200
      %p202 = scmp.eq.s32.totalorder %s29, 0
      %p203 = por %p201, %p202
      %s205 = sadd.s32 %s204, 1
      %p208 = scmp.eq.s32.totalorder %s23, 1
      %p209 = scmp.ne.s32.totalorder %s204, %s206
      %p210 = scmp.eq.s32.totalorder %s23, 0
      %p211 = por %p209, %p210
      %p212 = scmp.ne.s32.totalorder %s204, %s206
      %p213 = scmp.eq.s32.totalorder %s28, 1
      %p214 = por %p212, %p213
      %p215 = scmp.ne.s32.totalorder %s206, %s207
      %p216 = scmp.eq.s32.totalorder %s28, 0
      %p217 = por %p215, %p216
      %p218 = scmp.ne.s32.totalorder %s206, %s207
      %p219 = scmp.eq.s32.totalorder %s29, 1
      %p220 = por %p218, %p219
      %p222 = scmp.ne.s32.totalorder %s207, %s221
      %p223 = scmp.eq.s32.totalorder %s29, 0
      %p224 = por %p222, %p223
      %s226 = sadd.s32 %s225, 1
      %p229 = scmp.eq.s32.totalorder %s23, 1
      %p230 = scmp.ne.s32.totalorder %s225, %s227
      %p231 = scmp.eq.s32.totalorder %s23, 0
      %p232 = por %p230, %p231
      %p233 = scmp.ne.s32.totalorder %s225, %s227
      %p234 = scmp.eq.s32.totalorder %s28, 1
      %p235 = por %p233, %p234
      %p236 = scmp.ne.s32.totalorder %s227, %s228
      %p237 = scmp.eq.s32.totalorder %s28, 0
      %p238 = por %p236, %p237
      %p239 = scmp.ne.s32.totalorder %s227, %s228
      %p240 = scmp.eq.s32.totalorder %s29, 1
      %p241 = por %p239, %p240
      %p243 = scmp.ne.s32.totalorder %s228, %s242
      %p244 = scmp.eq.s32.totalorder %s29, 0
      %p245 = por %p243, %p244
      %s247 = sadd.s32 %s246, 1
      %p250 = scmp.eq.s32.totalorder %s23, 1
      %p251 = scmp.ne.s32.totalorder %s246, %s248
      %p252 = scmp.eq.s32.totalorder %s23, 0
      %p253 = por %p251, %p252
      %p254 = scmp.ne.s32.totalorder %s246, %s248
      %p255 = scmp.eq.s32.totalorder %s28, 1
      %p256 = por %p254, %p255
      %p257 = scmp.ne.s32.totalorder %s248, %s249
      %p258 = scmp.eq.s32.totalorder %s28, 0
      %p259 = por %p257, %p258
      %p260 = scmp.ne.s32.totalorder %s248, %s249
      %p261 = scmp.eq.s32.totalorder %s29, 1
      %p262 = por %p260, %p261
      %p264 = scmp.ne.s32.totalorder %s249, %s263
      %p265 = scmp.eq.s32.totalorder %s29, 0
      %p266 = por %p264, %p265
      %s268 = sadd.s32 %s267, 1
      %p271 = scmp.eq.s32.totalorder %s23, 1
      %p272 = scmp.ne.s32.totalorder %s267, %s269
      %p273 = scmp.eq.s32.totalorder %s23, 0
      %p274 = por %p272, %p273
      %p275 = scmp.ne.s32.totalorder %s267, %s269
      %p276 = scmp.eq.s32.totalorder %s28, 1
      %p277 = por %p275, %p276
      %p278 = scmp.ne.s32.totalorder %s269, %s270
      %p279 = scmp.eq.s32.totalorder %s28, 0
      %p280 = por %p278, %p279
      %p281 = scmp.ne.s32.totalorder %s269, %s270
      %p282 = scmp.eq.s32.totalorder %s29, 1
      %p283 = por %p281, %p282
      %p285 = scmp.ne.s32.totalorder %s270, %s284
      %p286 = scmp.eq.s32.totalorder %s29, 0
      %p287 = por %p285, %p286
      %s288 = ssub.s32 %s23, %s30
      %p289 = scmp.eq.s32.totalorder %s288, 0
      %s291 = sadd.s32 %s290, 1
      %s292 = scalar_select %p289, %s290, %s291
      %p295 = pneg %p289
      %p296 = scmp.eq.s32.totalorder %s23, 1
      %p297 = por %p295, %p296
      %p298 = scmp.ne.s32.totalorder %s290, %s293
      %p299 = scmp.eq.s32.totalorder %s23, 0
      %p300 = por %p298, %p299
      %p301 = scmp.ne.s32.totalorder %s290, %s293
      %p302 = scmp.eq.s32.totalorder %s28, 1
      %p303 = por %p301, %p302
      %p304 = scmp.ne.s32.totalorder %s293, %s294
      %p305 = scmp.eq.s32.totalorder %s28, 0
      %p306 = por %p304, %p305
      %p307 = scmp.ne.s32.totalorder %s293, %s294
      %p308 = scmp.eq.s32.totalorder %s29, 1
      %p309 = por %p307, %p308
      %p311 = scmp.ne.s32.totalorder %s294, %s310
      %p312 = scmp.eq.s32.totalorder %s29, 0
      %p313 = por %p311, %p312
      %p314 = scmp.le.s32.totalorder 1, %s23
      %p315 = scmp.lt.s32.totalorder %s23, 3
      %p316 = pnand %p314, %p315
      %p317 = pneg %p316
      // Predicated region
      $region9: #{tpu_custom_call.1} parent=5 // pred_check
        _
      $region10: #{tpu_custom_call.1} parent=5 // pred_check_branch
        %319 = sbr.rel (%p316) target = $region12
      $region11: #{tpu_custom_call.1} parent=5 // pred_region
        %s320 = ssub.s32 %s23, 1
        // Predicated region
        $region13: #{tpu_custom_call.1} parent=11 // pred_check
          %p321 = pneg %p70
        $region14: #{tpu_custom_call.1} parent=11 // pred_check_branch
          %323 = sbr.rel (%p321) target = $region16
        $region15: #{tpu_custom_call.1} parent=11 // pred_region
          %325 = vsyncadd [#allocation6], 0
          %s326 = sshll.u32 %s1, 4
          %s327 = int_to_ptr.hbm [resolvable:$true] %s326
          %s328 = sshll.u32 [#allocation5], 4
          %s329 = int_to_ptr.vmem [resolvable:$true] %s328
          %334 = dma.hbm_to_vmem [thread:$0]  %s327, 1728, %s329, [#allocation6], 64, 64, 4
        $region16: #{tpu_custom_call.1} parent=11 // pred_fallthru
          _
        // Predicated region
        $region17: #{tpu_custom_call.1} parent=11 // pred_check
          %p335 = pneg %p91
        $region18: #{tpu_custom_call.1} parent=11 // pred_check_branch
          %337 = sbr.rel (%p335) target = $region20
        $region19: #{tpu_custom_call.1} parent=11 // pred_region
          _
        $region20: #{tpu_custom_call.1} parent=11 // pred_fallthru
          _
        // Predicated region
        $region21: #{tpu_custom_call.1} parent=11 // pred_check
          %p338 = pneg %p112
        $region22: #{tpu_custom_call.1} parent=11 // pred_check_branch
          %340 = sbr.rel (%p338) target = $region24
        $region23: #{tpu_custom_call.1} parent=11 // pred_region
          _
        $region24: #{tpu_custom_call.1} parent=11 // pred_fallthru
          _
        // Predicated region
        $region25: #{tpu_custom_call.1} parent=11 // pred_check
          %p341 = pneg %p133
        $region26: #{tpu_custom_call.1} parent=11 // pred_check_branch
          %343 = sbr.rel (%p341) target = $region28
        $region27: #{tpu_custom_call.1} parent=11 // pred_region
          %345 = vsyncadd [#allocation9], 0
          %s346 = sshll.u32 %s4, 4
          %s347 = int_to_ptr.hbm [resolvable:$true] %s346
          %s348 = sshll.u32 [#allocation8], 4
          %s349 = int_to_ptr.vmem [resolvable:$true] %s348
          %354 = dma.hbm_to_vmem [thread:$0]  %s347, 3456, %s349, [#allocation9], 64, 64, 4
        $region28: #{tpu_custom_call.1} parent=11 // pred_fallthru
          _
        // Predicated region
        $region29: #{tpu_custom_call.1} parent=11 // pred_check
          %p355 = pneg %p154
        $region30: #{tpu_custom_call.1} parent=11 // pred_check_branch
          %357 = sbr.rel (%p355) target = $region32
        $region31: #{tpu_custom_call.1} parent=11 // pred_region
          _
        $region32: #{tpu_custom_call.1} parent=11 // pred_fallthru
          _
        // Predicated region
        $region33: #{tpu_custom_call.1} parent=11 // pred_check
          %p358 = pneg %p175
        $region34: #{tpu_custom_call.1} parent=11 // pred_check_branch
          %360 = sbr.rel (%p358) target = $region36
        $region35: #{tpu_custom_call.1} parent=11 // pred_region
          _
        $region36: #{tpu_custom_call.1} parent=11 // pred_fallthru
          _
        // Predicated region
        $region37: #{tpu_custom_call.1} parent=11 // pred_check
          %p361 = pneg %p196
        $region38: #{tpu_custom_call.1} parent=11 // pred_check_branch
          %363 = sbr.rel (%p361) target = $region40
        $region39: #{tpu_custom_call.1} parent=11 // pred_region
          _
        $region40: #{tpu_custom_call.1} parent=11 // pred_fallthru
          _
        // Predicated region
        $region41: #{tpu_custom_call.1} parent=11 // pred_check
          %p364 = pneg %p217
        $region42: #{tpu_custom_call.1} parent=11 // pred_check_branch
          %366 = sbr.rel (%p364) target = $region44
        $region43: #{tpu_custom_call.1} parent=11 // pred_region
          _
        $region44: #{tpu_custom_call.1} parent=11 // pred_fallthru
          _
        // Predicated region
        $region45: #{tpu_custom_call.1} parent=11 // pred_check
          %p367 = pneg %p238
        $region46: #{tpu_custom_call.1} parent=11 // pred_check_branch
          %369 = sbr.rel (%p367) target = $region48
        $region47: #{tpu_custom_call.1} parent=11 // pred_region
          _
        $region48: #{tpu_custom_call.1} parent=11 // pred_fallthru
          _
        // Predicated region
        $region49: #{tpu_custom_call.1} parent=11 // pred_check
          %p370 = pneg %p259
        $region50: #{tpu_custom_call.1} parent=11 // pred_check_branch
          %372 = sbr.rel (%p370) target = $region52
        $region51: #{tpu_custom_call.1} parent=11 // pred_region
          _
        $region52: #{tpu_custom_call.1} parent=11 // pred_fallthru
          _
        // Predicated region
        $region53: #{tpu_custom_call.1} parent=11 // pred_check
          %p373 = pneg %p280
        $region54: #{tpu_custom_call.1} parent=11 // pred_check_branch
          %375 = sbr.rel (%p373) target = $region56
        $region55: #{tpu_custom_call.1} parent=11 // pred_region
          %377 = vsyncadd [#allocation9], 0
          %s378 = sshll.u32 %s11, 4
          %s379 = int_to_ptr.hbm [resolvable:$true] %s378
          %s380 = sshll.u32 [#allocation10], 4
          %s381 = int_to_ptr.vmem [resolvable:$true] %s380
          %386 = dma.hbm_to_vmem [thread:$0]  %s379, 2048, %s381, [#allocation9], 128, 128, 8
        $region56: #{tpu_custom_call.1} parent=11 // pred_fallthru
          _
      $region12: #{tpu_custom_call.1} parent=5 // pred_fallthru
        _
      %p387 = scmp.lt.s32.totalorder %s23, 2
      // Predicated region
      $region57: #{tpu_custom_call.1} parent=5 // pred_check
        %p388 = pneg %p387
      $region58: #{tpu_custom_call.1} parent=5 // pred_check_branch
        %390 = sbr.rel (%p388) target = $region60
      $region59: #{tpu_custom_call.1} parent=5 // pred_region
        // Predicated region
        $region61: #{tpu_custom_call.1} parent=59 // pred_check
          %p391 = pneg %p43
        $region62: #{tpu_custom_call.1} parent=59 // pred_check_branch
          %393 = sbr.rel (%p391) target = $region64
        $region63: #{tpu_custom_call.1} parent=59 // pred_region
          %p394 = scmp.lt.s32.totalorder %s23, 1
          %s395 = scalar_select %p394, %s23, 1
          %s396 = smul.addr %s395, 3
          %s397 = smul.addr %s396, 8
          %s398 = scalar_lea.vmem %s0, %s397
        $region64: #{tpu_custom_call.1} parent=59 // pred_fallthru
          _
      $region60: #{tpu_custom_call.1} parent=5 // pred_fallthru
        _
      %p399 = scmp.le.s32.totalorder 1, %s23
      %p400 = scmp.lt.s32.totalorder %s23, 3
      %p401 = pnand %p399, %p400
      %p402 = pneg %p401
      // Predicated region
      $region65: #{tpu_custom_call.1} parent=5 // pred_check
        _
      $region66: #{tpu_custom_call.1} parent=5 // pred_check_branch
        %404 = sbr.rel (%p401) target = $region68
      $region67: #{tpu_custom_call.1} parent=5 // pred_region
        %s405 = ssub.s32 %s23, 1
        // Predicated region
        $region69: #{tpu_custom_call.1} parent=67 // pred_check
          %p406 = pneg %p70
        $region70: #{tpu_custom_call.1} parent=67 // pred_check_branch
          %408 = sbr.rel (%p406) target = $region72
        $region71: #{tpu_custom_call.1} parent=67 // pred_region
          %410 = dma.done [#allocation6], 1728
        $region72: #{tpu_custom_call.1} parent=67 // pred_fallthru
          _
        // Predicated region
        $region73: #{tpu_custom_call.1} parent=67 // pred_check
          %p411 = pneg %p133
        $region74: #{tpu_custom_call.1} parent=67 // pred_check_branch
          %413 = sbr.rel (%p411) target = $region76
        $region75: #{tpu_custom_call.1} parent=67 // pred_region
          %415 = dma.done [#allocation9], 3456
        $region76: #{tpu_custom_call.1} parent=67 // pred_fallthru
          _
        // Predicated region
        $region77: #{tpu_custom_call.1} parent=67 // pred_check
          %p416 = pneg %p280
        $region78: #{tpu_custom_call.1} parent=67 // pred_check_branch
          %418 = sbr.rel (%p416) target = $region80
        $region79: #{tpu_custom_call.1} parent=67 // pred_region
          %420 = dma.done [#allocation9], 2048
        $region80: #{tpu_custom_call.1} parent=67 // pred_fallthru
          _
        %p421 = scmp.lt.s32.totalorder %s28, 1
        %s422 = scalar_select %p421, %s28, 1
        %s423 = smul.addr %s422, 3
        %s424 = smul.addr %s423, 8
        %s425 = scalar_lea.vmem %s0, %s424
        %p426 = pneg %p49
        %p427 = pneg %p46
        %p428 = pneg %p70
        %p429 = pneg %p67
        %p430 = pneg %p91
        %p431 = pneg %p88
        %p432 = pneg %p112
        %p433 = pneg %p109
        %p434 = pneg %p133
        %p435 = pneg %p130
        %p436 = pneg %p154
        %p437 = pneg %p151
        %p438 = pneg %p175
        %p439 = pneg %p172
        %p440 = pneg %p196
        %p441 = pneg %p193
        %p442 = pneg %p217
        %p443 = pneg %p214
        %p444 = pneg %p238
        %p445 = pneg %p235
        %p446 = pneg %p259
        %p447 = pneg %p256
        %p448 = pneg %p280
        %p449 = pneg %p277
        %p450 = pneg %p306
        %p451 = pneg %p303
        %s452 = sand.u32 %s293, 1
        %s453 = scalar_lea.sflag [#allocation7], %s452
        %s454 = sand.u32 %s293, 1
        %s455 = smul.addr %s454, 16
        %s456 = scalar_lea.vmem [#allocation11], %s455
        %p457 = scmp.lt.s32.totalorder %s28, 1
        %s458 = scalar_select %p457, %s28, 1
        %s459 = smul.addr %s458, 3
        %s460 = smul.addr %s459, 8
        %s461 = scalar_lea.vmem %s0, %s460
        %v463 = vld [vmem:[%s461] sm:$0xff]
        %v464 = vld [vmem:[%s461 + $0x8] sm:$0xff]
        %vm465 = vcmask 588800
        %466 = vst.msk [vmem:[#allocation2] sm:$0xff] %vm465, %v463
        %467 = vst.msk [vmem:[#allocation2 + $0x10] sm:$0xff] %vm465, %v464
        %v468 = vld [vmem:[%s461 + $0x1] sm:$0xff]
        %v469 = vld [vmem:[%s461 + $0x9] sm:$0xff]
        %472 = vrot.lane.b32.xlu0 %v468, 72
        %v473 = vpop.permute.xlu0 %472
        %474 = vrot.lane.b32.xlu0 %v469, 72
        %v475 = vpop.permute.xlu0 %474
        %vm478 = vcmask 1048128
        %479 = vst.msk [vmem:[#allocation2] sm:$0xff] %vm478, %v473
        %vm480 = vcmask 130048
        %481 = vst.msk [vmem:[#allocation2 + $0x8] sm:$0xff] %vm480, %v473
        %482 = vst.msk [vmem:[#allocation2 + $0x10] sm:$0xff] %vm478, %v475
        %483 = vst.msk [vmem:[#allocation2 + $0x18] sm:$0xff] %vm480, %v475
        %v484 = vld [vmem:[%s461 + $0x2] sm:$0xff]
        %v485 = vld [vmem:[%s461 + $0xa] sm:$0xff]
        %488 = vrot.lane.b32.xlu0 %v484, 16
        %v489 = vpop.permute.xlu0 %488
        %490 = vrot.lane.b32.xlu0 %v485, 16
        %v491 = vpop.permute.xlu0 %490
        %vm494 = vcmask 720000
        %495 = vst.msk [vmem:[#allocation2 + $0x8] sm:$0xff] %vm494, %v489
        %496 = vst.msk [vmem:[#allocation2 + $0x18] sm:$0xff] %vm494, %v491
        %v497 = vld [vmem:[#allocation2] sm:$0xff]
        %v498 = vld [vmem:[#allocation2 + $0x8] sm:$0xff]
        %v499 = vld [vmem:[#allocation2 + $0x10] sm:$0xff]
        %v500 = vld [vmem:[#allocation2 + $0x18] sm:$0xff]
        %v501 = vpack.c.bf16 %v499, %v497
        %v502 = vpack.c.bf16 %v500, %v498
        %v503 = vld [vmem:[#allocation5] sm:$0xf]
        %v504 = vld [vmem:[#allocation5 + $0x4] sm:$0xf]
        %v505 = vld [vmem:[#allocation5 + $0x8] sm:$0xf]
        %v506 = vld [vmem:[#allocation5 + $0xc] sm:$0xf]
        %v507 = vld [vmem:[#allocation5 + $0x10] sm:$0xf]
        %v508 = vld [vmem:[#allocation5 + $0x14] sm:$0xf]
        %v509 = vld [vmem:[#allocation5 + $0x18] sm:$0xf]
        %v510 = vld [vmem:[#allocation5 + $0x1c] sm:$0xf]
        %v511 = vld [vmem:[#allocation5 + $0x20] sm:$0xf]
        %v512 = vld [vmem:[#allocation5 + $0x24] sm:$0xf]
        %v513 = vld [vmem:[#allocation5 + $0x28] sm:$0xf]
        %v514 = vld [vmem:[#allocation5 + $0x2c] sm:$0xf]
        %v515 = vld [vmem:[#allocation5 + $0x30] sm:$0xf]
        %v516 = vld [vmem:[#allocation5 + $0x34] sm:$0xf]
        %v517 = vld [vmem:[#allocation5 + $0x38] sm:$0xf]
        %v518 = vld [vmem:[#allocation5 + $0x3c] sm:$0xf]
        %v519 = vld [vmem:[#allocation5 + $0x40] sm:$0xf]
        %v520 = vld [vmem:[#allocation5 + $0x44] sm:$0xf]
        %v521 = vld [vmem:[#allocation5 + $0x48] sm:$0xf]
        %v522 = vld [vmem:[#allocation5 + $0x4c] sm:$0xf]
        %v523 = vld [vmem:[#allocation5 + $0x50] sm:$0xf]
        %v524 = vld [vmem:[#allocation5 + $0x54] sm:$0xf]
        %v525 = vld [vmem:[#allocation5 + $0x58] sm:$0xf]
        %v526 = vld [vmem:[#allocation5 + $0x5c] sm:$0xf]
        %v527 = vld [vmem:[#allocation5 + $0x60] sm:$0xf]
        %v528 = vld [vmem:[#allocation5 + $0x64] sm:$0xf]
        %v529 = vld [vmem:[#allocation5 + $0x68] sm:$0xf]
        %v557 = vunpack.c.l.b16 %v503
        %v558 = vunpack.c.l.b16 %v504
        %v559 = vunpack.c.l.b16 %v505
        %v560 = vunpack.c.l.b16 %v506
        %v561 = vunpack.c.l.b16 %v507
        %v562 = vunpack.c.l.b16 %v508
        %v563 = vunpack.c.l.b16 %v509
        %v564 = vunpack.c.l.b16 %v510
        %v565 = vunpack.c.l.b16 %v511
        %v566 = vunpack.c.l.b16 %v512
        %v567 = vunpack.c.l.b16 %v513
        %v568 = vunpack.c.l.b16 %v514
        %v569 = vunpack.c.l.b16 %v515
        %v570 = vunpack.c.l.b16 %v516
        %v571 = vunpack.c.l.b16 %v517
        %v572 = vunpack.c.l.b16 %v518
        %v573 = vunpack.c.l.b16 %v519
        %v574 = vunpack.c.l.b16 %v520
        %v575 = vunpack.c.l.b16 %v521
        %v576 = vunpack.c.l.b16 %v522
        %v577 = vunpack.c.l.b16 %v523
        %v578 = vunpack.c.l.b16 %v524
        %v579 = vunpack.c.l.b16 %v525
        %v580 = vunpack.c.l.b16 %v526
        %v581 = vunpack.c.l.b16 %v527
        %v582 = vunpack.c.l.b16 %v528
        %v583 = vunpack.c.l.b16 %v529
        %v584 = vpack.c.b16 %v558, %v557
        %v585 = vpack.c.b16 %v560, %v559
        %v586 = vpack.c.b16 %v562, %v561
        %v587 = vpack.c.b16 %v564, %v563
        %v588 = vpack.c.b16 %v566, %v565
        %v589 = vpack.c.b16 %v568, %v567
        %v590 = vpack.c.b16 %v570, %v569
        %v591 = vpack.c.b16 %v572, %v571
        %v592 = vpack.c.b16 %v574, %v573
        %v593 = vpack.c.b16 %v576, %v575
        %v594 = vpack.c.b16 %v578, %v577
        %v595 = vpack.c.b16 %v580, %v579
        %v596 = vpack.c.b16 %v582, %v581
        %v597 = vpack.c.b16 %v583, %v583
        %vm611 = vcmask 719872
        %v613 = vsel %vm611, %v502, 0
        %vm615 = vcmask 1043456
        %v617 = vsel %vm615, %v597, 0
        %619 = vmatpush.bf16.msra.mxu0 %v591
        %620 = vmatpush.bf16.msra.mxu0 %v590
        %621 = vmatpush.bf16.msra.mxu0 %v589
        %622 = vmatpush.bf16.msra.mxu0 %v588
        %623 = vmatpush.bf16.msra.mxu0 %v587
        %624 = vmatpush.bf16.msra.mxu0 %v586
        %625 = vmatpush.bf16.msra.mxu0 %v585
        %626 = vmatpush.bf16.msra.mxu0 %v584
        %627 = vmatmul.bf16.gmra.mxu0 %v501
        %v628 = vpop.f32.mrf.mxu0
        %v629 = vadd.f32 0.0, %v628
        %v630 = vpop.f32.mrf.mxu0
        %v631 = vadd.f32 0.0, %v630
        %632 = vdwg.mxu0
        %633 = vmatpush.bf16.msra.mxu0 0
        %634 = vmatpush.bf16.msra.mxu0 0
        %635 = vmatpush.bf16.msra.mxu0 %v617
        %636 = vmatpush.bf16.msra.mxu0 %v596
        %637 = vmatpush.bf16.msra.mxu0 %v595
        %638 = vmatpush.bf16.msra.mxu0 %v594
        %639 = vmatpush.bf16.msra.mxu0 %v593
        %640 = vmatpush.bf16.msra.mxu0 %v592
        %641 = vmatmul.bf16.gmra.mxu0 %v613
        %v642 = vpop.f32.mrf.mxu0
        %v643 = vadd.f32 %v629, %v642
        %v644 = vpop.f32.mrf.mxu0
        %v645 = vadd.f32 %v631, %v644
        %646 = vdwg.mxu0
        %v647 = vld [vmem:[%s2] sm:$0x1]
        %v649 = vperm.slane %v647, 0
        %v651 = vmul.f32 %v643, %v649
        %v652 = vmul.f32 %v645, %v649
        %v653 = vld [vmem:[%s3] sm:$0x1]
        %v655 = vperm.slane %v653, 0
        %v657 = vadd.f32 %v651, %v655
        %v658 = vadd.f32 %v652, %v655
        %v659 = vxor.u32 %v657, 2147483648
        %v660 = vxor.u32 %v658, 2147483648
        %v661 = vmul.f32 %v659, 1.442695
        %v662 = vpow.pop %v661
        %v663 = vmul.f32 %v660, 1.442695
        %v664 = vpow.pop %v663
        %v665 = vadd.f32 %v662, 1.0
        %v666 = vadd.f32 %v664, 1.0
        %v667 = vrcp.pop %v665
        %v668 = vmul.f32 %v665, %v667
        %v669 = vsub.f32 1.0, %v668
        %v670 = vmul.f32 %v667, %v669
        %v671 = vadd.f32 %v667, %v670
        %vm672 = vweird.f32 %v665
        %vm673 = vweird.f32 %v667
        %vm674 = vmor %vm672, %vm673
        %v675 = vsel %vm674, %v667, %v671
        %v676 = vand.u32 2147483647, %v665
        %vm677 = vcmp.eq.f32.partialorder %v676, 8.507059e+37
        %v678 = vand.u32 %v665, 2147483648
        %v679 = vor.u32 1.1754944e-38, %v678
        %v680 = vsel %vm677, %v679, %v675
        %v681 = vmul.f32 1.0, %v680
        %v682 = vrcp.pop %v666
        %v683 = vmul.f32 %v666, %v682
        %v684 = vsub.f32 1.0, %v683
        %v685 = vmul.f32 %v682, %v684
        %v686 = vadd.f32 %v682, %v685
        %vm687 = vweird.f32 %v666
        %vm688 = vweird.f32 %v682
        %vm689 = vmor %vm687, %vm688
        %v690 = vsel %vm689, %v682, %v686
        %v691 = vand.u32 2147483647, %v666
        %vm692 = vcmp.eq.f32.partialorder %v691, 8.507059e+37
        %v693 = vand.u32 %v666, 2147483648
        %v694 = vor.u32 1.1754944e-38, %v693
        %v695 = vsel %vm692, %v694, %v690
        %v696 = vmul.f32 1.0, %v695
        %v697 = vmul.f32 %v657, %v681
        %v698 = vmul.f32 %v658, %v696
        %v699 = vlaneseq
        %vm700 = vcmp.ge.s32.totalorder %v699, 0
        %vm701 = vcmp.lt.s32.totalorder %v699, 144
        %vm702 = vmand %vm700, %vm701
        %703 = vst.msk [vmem:[#allocation3] ss:$8 sm:$0x3] %vm702, 0.0
        %704 = vst.msk [vmem:[#allocation3] ss:$8 sm:$0x0] %vm702, 0.0
        %s705 = scalar_lea.vmem [#allocation3], 33
        %706 = vst.msk [vmem:[%s705] ss:$8 sm:$0x3] %vm702, 0.0
        %707 = vst.msk [vmem:[%s705] ss:$8 sm:$0x0] %vm702, 0.0
        %vm708 = vcmask 64512
        %709 = vst.msk [vmem:[#allocation3] sm:$0xff] %vm708, 0.0
        %710 = vst.msk [vmem:[#allocation3 + $0x10] sm:$0xff] %vm708, 0.0
        %vm711 = vcmask 58368
        %712 = vst.msk [vmem:[#allocation3 + $0x20] sm:$0x3] %vm711, 0.0
        %vm713 = vcmask 130112
        %714 = vst.msk [vmem:[#allocation3 + $0x8] sm:$0xff] %vm713, 0.0
        %715 = vst.msk [vmem:[#allocation3 + $0x18] sm:$0xff] %vm713, 0.0
        %vm716 = vcmask 123968
        %717 = vst.msk [vmem:[#allocation3 + $0x28] sm:$0x3] %vm716, 0.0
        %vm720 = vcmask 1040384
        %v721 = vrot.slane %v697, 7
        %v722 = vrot.slane %v698, 7
        %v723 = vsel %vm720, %v721, %v722
        %724 = vrot.lane.b32.xlu0 %v721, 8
        %v725 = vpop.permute.xlu0 %724
        %726 = vrot.lane.b32.xlu0 %v723, 8
        %v727 = vpop.permute.xlu0 %726
        %728 = vrot.lane.b32.xlu0 %v722, 8
        %v729 = vpop.permute.xlu0 %728
        %vm733 = vcmask 1047617
        %734 = vst.msk [vmem:[#allocation3] sm:$0xfe] %vm733, %v725
        %vm735 = vcmask 64513
        %736 = vst.msk [vmem:[#allocation3 + $0x8] sm:$0xfe] %vm735, %v725
        %vm737 = vcmask 1047616
        %738 = vst.msk [vmem:[#allocation3 + $0x10] sm:$0xff] %vm737, %v727
        %739 = vst.msk [vmem:[#allocation3 + $0x18] sm:$0xff] %vm708, %v727
        %vm740 = vcmask 1040448
        %741 = vst.msk [vmem:[#allocation3 + $0x20] sm:$0x1] %vm740, %v729
        %vm742 = vcmask 57344
        %743 = vst.msk [vmem:[#allocation3 + $0x28] sm:$0x1] %vm742, %v729
        %v744 = vld [vmem:[#allocation3] sm:$0xff]
        %v745 = vld [vmem:[#allocation3 + $0x8] sm:$0xff]
        %v746 = vld [vmem:[#allocation3 + $0x10] sm:$0xff]
        %v747 = vld [vmem:[#allocation3 + $0x18] sm:$0xff]
        %748 = vst [vmem:[#allocation4] sm:$0xff] %v744
        %749 = vst.msk [vmem:[#allocation4 + $0x8] sm:$0xff] %vm480, %v745
        %750 = vst [vmem:[#allocation4 + $0x20] sm:$0xff] %v746
        %751 = vst.msk [vmem:[#allocation4 + $0x28] sm:$0xff] %vm480, %v747
        %v752 = vld [vmem:[#allocation3] sm:$0xfe]
        %v753 = vld [vmem:[#allocation3 + $0x8] sm:$0xfe]
        %v754 = vld [vmem:[#allocation3 + $0x10] sm:$0xff]
        %v755 = vld [vmem:[#allocation3 + $0x18] sm:$0xff]
        %v756 = vld [vmem:[#allocation3 + $0x20] sm:$0x1]
        %v757 = vld [vmem:[#allocation3 + $0x28] sm:$0x1]
        %vm764 = vcmask 1046528
        %v765 = vrot.slane %v752, 1
        %v766 = vrot.slane %v754, 1
        %v767 = vsel %vm764, %v765, %v766
        %v768 = vrot.slane %v753, 1
        %v769 = vrot.slane %v755, 1
        %v770 = vsel %vm764, %v768, %v769
        %v771 = vrot.slane %v756, 1
        %v772 = vsel %vm764, %v766, %v771
        %v773 = vrot.slane %v757, 1
        %v774 = vsel %vm764, %v769, %v773
        %775 = vrot.lane.b32.xlu0 %v767, 16
        %v776 = vpop.permute.xlu0 %775
        %777 = vrot.lane.b32.xlu0 %v770, 16
        %v778 = vpop.permute.xlu0 %777
        %779 = vrot.lane.b32.xlu0 %v772, 16
        %v780 = vpop.permute.xlu0 %779
        %781 = vrot.lane.b32.xlu0 %v774, 16
        %v782 = vpop.permute.xlu0 %781
        %v783 = vsel %vm480, %v776, %v778
        %v784 = vsel %vm480, %v780, %v782
        %vm789 = vcmask 1047680
        %790 = vst.msk [vmem:[#allocation4 + $0x8] sm:$0xff] %vm789, %v776
        %vm791 = vcmask 261120
        %792 = vst.msk [vmem:[#allocation4 + $0x10] sm:$0xff] %vm791, %v783
        %793 = vst.msk [vmem:[#allocation4 + $0x28] sm:$0xff] %vm789, %v780
        %794 = vst.msk [vmem:[#allocation4 + $0x30] sm:$0xff] %vm791, %v784
        %v795 = vld [vmem:[#allocation3] sm:$0xfc]
        %v796 = vld [vmem:[#allocation3 + $0x8] sm:$0xfc]
        %v797 = vld [vmem:[#allocation3 + $0x10] sm:$0xff]
        %v798 = vld [vmem:[#allocation3 + $0x18] sm:$0xff]
        %v799 = vld [vmem:[#allocation3 + $0x20] sm:$0x3]
        %v800 = vld [vmem:[#allocation3 + $0x28] sm:$0x3]
        %vm807 = vcmask 1045504
        %v808 = vrot.slane %v795, 2
        %v809 = vrot.slane %v797, 2
        %v810 = vsel %vm807, %v808, %v809
        %v811 = vrot.slane %v796, 2
        %v812 = vrot.slane %v798, 2
        %v813 = vsel %vm807, %v811, %v812
        %v814 = vrot.slane %v799, 2
        %v815 = vsel %vm807, %v809, %v814
        %v816 = vrot.slane %v800, 2
        %v817 = vsel %vm807, %v812, %v816
        %818 = vrot.lane.b32.xlu0 %v810, 32
        %v819 = vpop.permute.xlu0 %818
        %820 = vrot.lane.b32.xlu0 %v813, 32
        %v821 = vpop.permute.xlu0 %820
        %822 = vrot.lane.b32.xlu0 %v815, 32
        %v823 = vpop.permute.xlu0 %822
        %824 = vrot.lane.b32.xlu0 %v817, 32
        %v825 = vpop.permute.xlu0 %824
        %v826 = vsel %vm791, %v819, %v821
        %v827 = vsel %vm791, %v823, %v825
        %vm832 = vcmask 1047808
        %833 = vst.msk [vmem:[#allocation4 + $0x10] sm:$0xff] %vm832, %v819
        %vm834 = vcmask 392192
        %835 = vst.msk [vmem:[#allocation4 + $0x18] sm:$0xff] %vm834, %v826
        %836 = vst.msk [vmem:[#allocation4 + $0x30] sm:$0xff] %vm832, %v823
        %837 = vst.msk [vmem:[#allocation4 + $0x38] sm:$0xff] %vm834, %v827
        %v838 = vld [vmem:[#allocation4] sm:$0xff]
        %v839 = vld [vmem:[#allocation4 + $0x8] sm:$0xff]
        %v840 = vld [vmem:[#allocation4 + $0x10] sm:$0xff]
        %v841 = vld [vmem:[#allocation4 + $0x18] sm:$0xff]
        %v842 = vld [vmem:[#allocation4 + $0x20] sm:$0xff]
        %v843 = vld [vmem:[#allocation4 + $0x28] sm:$0xff]
        %v844 = vld [vmem:[#allocation4 + $0x30] sm:$0xff]
        %v845 = vld [vmem:[#allocation4 + $0x38] sm:$0xff]
        %v846 = vpack.c.bf16 %v842, %v838
        %v847 = vpack.c.bf16 %v843, %v839
        %v848 = vpack.c.bf16 %v844, %v840
        %v849 = vpack.c.bf16 %v845, %v841
        %v850 = vld [vmem:[#allocation8] sm:$0xf]
        %v851 = vld [vmem:[#allocation8 + $0x4] sm:$0xf]
        %v852 = vld [vmem:[#allocation8 + $0x8] sm:$0xf]
        %v853 = vld [vmem:[#allocation8 + $0xc] sm:$0xf]
        %v854 = vld [vmem:[#allocation8 + $0x10] sm:$0xf]
        %v855 = vld [vmem:[#allocation8 + $0x14] sm:$0xf]
        %v856 = vld [vmem:[#allocation8 + $0x18] sm:$0xf]
        %v857 = vld [vmem:[#allocation8 + $0x1c] sm:$0xf]
        %v858 = vld [vmem:[#allocation8 + $0x20] sm:$0xf]
        %v859 = vld [vmem:[#allocation8 + $0x24] sm:$0xf]
        %v860 = vld [vmem:[#allocation8 + $0x28] sm:$0xf]
        %v861 = vld [vmem:[#allocation8 + $0x2c] sm:$0xf]
        %v862 = vld [vmem:[#allocation8 + $0x30] sm:$0xf]
        %v863 = vld [vmem:[#allocation8 + $0x34] sm:$0xf]
        %v864 = vld [vmem:[#allocation8 + $0x38] sm:$0xf]
        %v865 = vld [vmem:[#allocation8 + $0x3c] sm:$0xf]
        %v866 = vld [vmem:[#allocation8 + $0x40] sm:$0xf]
        %v867 = vld [vmem:[#allocation8 + $0x44] sm:$0xf]
        %v868 = vld [vmem:[#allocation8 + $0x48] sm:$0xf]
        %v869 = vld [vmem:[#allocation8 + $0x4c] sm:$0xf]
        %v870 = vld [vmem:[#allocation8 + $0x50] sm:$0xf]
        %v871 = vld [vmem:[#allocation8 + $0x54] sm:$0xf]
        %v872 = vld [vmem:[#allocation8 + $0x58] sm:$0xf]
        %v873 = vld [vmem:[#allocation8 + $0x5c] sm:$0xf]
        %v874 = vld [vmem:[#allocation8 + $0x60] sm:$0xf]
        %v875 = vld [vmem:[#allocation8 + $0x64] sm:$0xf]
        %v876 = vld [vmem:[#allocation8 + $0x68] sm:$0xf]
        %v877 = vld [vmem:[#allocation8 + $0x6c] sm:$0xf]
        %v878 = vld [vmem:[#allocation8 + $0x70] sm:$0xf]
        %v879 = vld [vmem:[#allocation8 + $0x74] sm:$0xf]
        %v880 = vld [vmem:[#allocation8 + $0x78] sm:$0xf]
        %v881 = vld [vmem:[#allocation8 + $0x7c] sm:$0xf]
        %v882 = vld [vmem:[#allocation8 + $0x80] sm:$0xf]
        %v883 = vld [vmem:[#allocation8 + $0x84] sm:$0xf]
        %v884 = vld [vmem:[#allocation8 + $0x88] sm:$0xf]
        %v885 = vld [vmem:[#allocation8 + $0x8c] sm:$0xf]
        %v886 = vld [vmem:[#allocation8 + $0x90] sm:$0xf]
        %v887 = vld [vmem:[#allocation8 + $0x94] sm:$0xf]
        %v888 = vld [vmem:[#allocation8 + $0x98] sm:$0xf]
        %v889 = vld [vmem:[#allocation8 + $0x9c] sm:$0xf]
        %v890 = vld [vmem:[#allocation8 + $0xa0] sm:$0xf]
        %v891 = vld [vmem:[#allocation8 + $0xa4] sm:$0xf]
        %v892 = vld [vmem:[#allocation8 + $0xa8] sm:$0xf]
        %v893 = vld [vmem:[#allocation8 + $0xac] sm:$0xf]
        %v894 = vld [vmem:[#allocation8 + $0xb0] sm:$0xf]
        %v895 = vld [vmem:[#allocation8 + $0xb4] sm:$0xf]
        %v896 = vld [vmem:[#allocation8 + $0xb8] sm:$0xf]
        %v897 = vld [vmem:[#allocation8 + $0xbc] sm:$0xf]
        %v898 = vld [vmem:[#allocation8 + $0xc0] sm:$0xf]
        %v899 = vld [vmem:[#allocation8 + $0xc4] sm:$0xf]
        %v900 = vld [vmem:[#allocation8 + $0xc8] sm:$0xf]
        %v901 = vld [vmem:[#allocation8 + $0xcc] sm:$0xf]
        %v902 = vld [vmem:[#allocation8 + $0xd0] sm:$0xf]
        %v903 = vld [vmem:[#allocation8 + $0xd4] sm:$0xf]
        %v904 = vld [vmem:[%s5] sm:$0x1]
        %v906 = vperm.slane %v904, 0
        %v962 = vunpack.c.l.b16 %v850
        %v963 = vunpack.c.l.b16 %v851
        %v964 = vunpack.c.l.b16 %v852
        %v965 = vunpack.c.l.b16 %v853
        %v966 = vunpack.c.l.b16 %v854
        %v967 = vunpack.c.l.b16 %v855
        %v968 = vunpack.c.l.b16 %v856
        %v969 = vunpack.c.l.b16 %v857
        %v970 = vunpack.c.l.b16 %v858
        %v971 = vunpack.c.l.b16 %v859
        %v972 = vunpack.c.l.b16 %v860
        %v973 = vunpack.c.l.b16 %v861
        %v974 = vunpack.c.l.b16 %v862
        %v975 = vunpack.c.l.b16 %v863
        %v976 = vunpack.c.l.b16 %v864
        %v977 = vunpack.c.l.b16 %v865
        %v978 = vunpack.c.l.b16 %v866
        %v979 = vunpack.c.l.b16 %v867
        %v980 = vunpack.c.l.b16 %v868
        %v981 = vunpack.c.l.b16 %v869
        %v982 = vunpack.c.l.b16 %v870
        %v983 = vunpack.c.l.b16 %v871
        %v984 = vunpack.c.l.b16 %v872
        %v985 = vunpack.c.l.b16 %v873
        %v986 = vunpack.c.l.b16 %v874
        %v987 = vunpack.c.l.b16 %v875
        %v988 = vunpack.c.l.b16 %v876
        %v989 = vunpack.c.l.b16 %v877
        %v990 = vunpack.c.l.b16 %v878
        %v991 = vunpack.c.l.b16 %v879
        %v992 = vunpack.c.l.b16 %v880
        %v993 = vunpack.c.l.b16 %v881
        %v994 = vunpack.c.l.b16 %v882
        %v995 = vunpack.c.l.b16 %v883
        %v996 = vunpack.c.l.b16 %v884
        %v997 = vunpack.c.l.b16 %v885
        %v998 = vunpack.c.l.b16 %v886
        %v999 = vunpack.c.l.b16 %v887
        %v1000 = vunpack.c.l.b16 %v888
        %v1001 = vunpack.c.l.b16 %v889
        %v1002 = vunpack.c.l.b16 %v890
        %v1003 = vunpack.c.l.b16 %v891
        %v1004 = vunpack.c.l.b16 %v892
        %v1005 = vunpack.c.l.b16 %v893
        %v1006 = vunpack.c.l.b16 %v894
        %v1007 = vunpack.c.l.b16 %v895
        %v1008 = vunpack.c.l.b16 %v896
        %v1009 = vunpack.c.l.b16 %v897
        %v1010 = vunpack.c.l.b16 %v898
        %v1011 = vunpack.c.l.b16 %v899
        %v1012 = vunpack.c.l.b16 %v900
        %v1013 = vunpack.c.l.b16 %v901
        %v1014 = vunpack.c.l.b16 %v902
        %v1015 = vunpack.c.l.b16 %v903
        %v1016 = vpack.c.b16 %v963, %v962
        %v1017 = vpack.c.b16 %v965, %v964
        %v1018 = vpack.c.b16 %v967, %v966
        %v1019 = vpack.c.b16 %v969, %v968
        %v1020 = vpack.c.b16 %v971, %v970
        %v1021 = vpack.c.b16 %v973, %v972
        %v1022 = vpack.c.b16 %v975, %v974
        %v1023 = vpack.c.b16 %v977, %v976
        %v1024 = vpack.c.b16 %v979, %v978
        %v1025 = vpack.c.b16 %v981, %v980
        %v1026 = vpack.c.b16 %v983, %v982
        %v1027 = vpack.c.b16 %v985, %v984
        %v1028 = vpack.c.b16 %v987, %v986
        %v1029 = vpack.c.b16 %v989, %v988
        %v1030 = vpack.c.b16 %v991, %v990
        %v1031 = vpack.c.b16 %v993, %v992
        %v1032 = vpack.c.b16 %v995, %v994
        %v1033 = vpack.c.b16 %v997, %v996
        %v1034 = vpack.c.b16 %v999, %v998
        %v1035 = vpack.c.b16 %v1001, %v1000
        %v1036 = vpack.c.b16 %v1003, %v1002
        %v1037 = vpack.c.b16 %v1005, %v1004
        %v1038 = vpack.c.b16 %v1007, %v1006
        %v1039 = vpack.c.b16 %v1009, %v1008
        %v1040 = vpack.c.b16 %v1011, %v1010
        %v1041 = vpack.c.b16 %v1013, %v1012
        %v1042 = vpack.c.b16 %v1015, %v1014
        %v1071 = vsel %vm834, %v849, 0
        %1073 = vmatpush.bf16.msra.mxu0 %v1023
        %1074 = vmatpush.bf16.msra.mxu0 %v1022
        %1075 = vmatpush.bf16.msra.mxu0 %v1021
        %1076 = vmatpush.bf16.msra.mxu0 %v1020
        %1077 = vmatpush.bf16.msra.mxu0 %v1019
        %1078 = vmatpush.bf16.msra.mxu0 %v1018
        %1079 = vmatpush.bf16.msra.mxu0 %v1017
        %1080 = vmatpush.bf16.msra.mxu0 %v1016
        %1081 = vmatmul.bf16.gmra.mxu0 %v846
        %v1082 = vpop.f32.mrf.mxu0
        %v1083 = vadd.f32 %v906, %v1082
        %v1084 = vpop.f32.mrf.mxu0
        %v1085 = vadd.f32 %v906, %v1084
        %1086 = vdwg.mxu0
        %1087 = vmatpush.bf16.msra.mxu0 %v1031
        %1088 = vmatpush.bf16.msra.mxu0 %v1030
        %1089 = vmatpush.bf16.msra.mxu0 %v1029
        %1090 = vmatpush.bf16.msra.mxu0 %v1028
        %1091 = vmatpush.bf16.msra.mxu0 %v1027
        %1092 = vmatpush.bf16.msra.mxu0 %v1026
        %1093 = vmatpush.bf16.msra.mxu0 %v1025
        %1094 = vmatpush.bf16.msra.mxu0 %v1024
        %1095 = vmatmul.bf16.gmra.mxu0 %v847
        %v1096 = vpop.f32.mrf.mxu0
        %v1097 = vadd.f32 %v1083, %v1096
        %v1098 = vpop.f32.mrf.mxu0
        %v1099 = vadd.f32 %v1085, %v1098
        %1100 = vdwg.mxu0
        %1101 = vmatpush.bf16.msra.mxu0 %v1039
        %1102 = vmatpush.bf16.msra.mxu0 %v1038
        %1103 = vmatpush.bf16.msra.mxu0 %v1037
        %1104 = vmatpush.bf16.msra.mxu0 %v1036
        %1105 = vmatpush.bf16.msra.mxu0 %v1035
        %1106 = vmatpush.bf16.msra.mxu0 %v1034
        %1107 = vmatpush.bf16.msra.mxu0 %v1033
        %1108 = vmatpush.bf16.msra.mxu0 %v1032
        %1109 = vmatmul.bf16.gmra.mxu0 %v848
        %v1110 = vpop.f32.mrf.mxu0
        %v1111 = vadd.f32 %v1097, %v1110
        %v1112 = vpop.f32.mrf.mxu0
        %v1113 = vadd.f32 %v1099, %v1112
        %1114 = vdwg.mxu0
        %1115 = vmatpush.bf16.msra.mxu0 0
        %1116 = vmatpush.bf16.msra.mxu0 0
        %1117 = vmatpush.bf16.msra.mxu0 0
        %1118 = vmatpush.bf16.msra.mxu0 0
        %1119 = vmatpush.bf16.msra.mxu0 0
        %1120 = vmatpush.bf16.msra.mxu0 %v1042
        %1121 = vmatpush.bf16.msra.mxu0 %v1041
        %1122 = vmatpush.bf16.msra.mxu0 %v1040
        %1123 = vmatmul.bf16.gmra.mxu0 %v1071
        %v1124 = vpop.f32.mrf.mxu0
        %v1125 = vadd.f32 %v1111, %v1124
        %v1126 = vpop.f32.mrf.mxu0
        %v1127 = vadd.f32 %v1113, %v1126
        %1128 = vdwg.mxu0
        %v1129 = vld [vmem:[#allocation10] sm:$0xff]
        %v1130 = vld [vmem:[#allocation10 + $0x8] sm:$0xff]
        %v1131 = vld [vmem:[#allocation10 + $0x10] sm:$0xff]
        %v1132 = vld [vmem:[#allocation10 + $0x18] sm:$0xff]
        %v1133 = vld [vmem:[#allocation10 + $0x20] sm:$0xff]
        %v1134 = vld [vmem:[#allocation10 + $0x28] sm:$0xff]
        %v1135 = vld [vmem:[#allocation10 + $0x30] sm:$0xff]
        %v1136 = vld [vmem:[#allocation10 + $0x38] sm:$0xff]
        %v1137 = vld [vmem:[#allocation10 + $0x40] sm:$0xff]
        %v1138 = vld [vmem:[#allocation10 + $0x48] sm:$0xff]
        %v1139 = vld [vmem:[#allocation10 + $0x50] sm:$0xff]
        %v1140 = vld [vmem:[#allocation10 + $0x58] sm:$0xff]
        %v1141 = vld [vmem:[#allocation10 + $0x60] sm:$0xff]
        %v1142 = vld [vmem:[#allocation10 + $0x68] sm:$0xff]
        %v1143 = vld [vmem:[#allocation10 + $0x70] sm:$0xff]
        %v1144 = vld [vmem:[#allocation10 + $0x78] sm:$0xff]
        %1145 = vmatpush.msra.mxu0 %v1144
        %1146 = vmatpush.msra.mxu0 %v1143
        %1147 = vmatpush.msra.mxu0 %v1142
        %1148 = vmatpush.msra.mxu0 %v1141
        %1149 = vmatpush.msra.mxu0 %v1140
        %1150 = vmatpush.msra.mxu0 %v1139
        %1151 = vmatpush.msra.mxu0 %v1138
        %1152 = vmatpush.msra.mxu0 %v1137
        %1153 = vmatpush.msra.mxu0 %v1136
        %1154 = vmatpush.msra.mxu0 %v1135
        %1155 = vmatpush.msra.mxu0 %v1134
        %1156 = vmatpush.msra.mxu0 %v1133
        %1157 = vmatpush.msra.mxu0 %v1132
        %1158 = vmatpush.msra.mxu0 %v1131
        %1159 = vmatpush.msra.mxu0 %v1130
        %1160 = vmatpush.msra.mxu0 %v1129
        %1161 = vmatmul.f32.gmra.mxu0 %v1125
        %v1162 = vpop.f32.mrf.mxu0
        %v1163 = vadd.f32 0.0, %v1162
        %1164 = vmatmul.f32.gmra.mxu0 %v1127
        %v1165 = vpop.f32.mrf.mxu0
        %v1166 = vadd.f32 0.0, %v1165
        %1167 = vdwg.mxu0
        %v1168 = vadd.f32 %v1163, %v1166
        %v1169 = vrot.slane %v1168, 4
        %v1170 = vadd.f32 %v1168, %v1169
        %v1171 = vrot.slane %v1170, 2
        %v1172 = vadd.f32 %v1170, %v1171
        %v1173 = vrot.slane %v1172, 1
        %v1174 = vadd.f32 %v1172, %v1173
        %v1175 = vmul.f32 %v1174, 0.00390625
        %v1176 = vsub.f32 %v1125, %v1175
        %v1177 = vsub.f32 %v1127, %v1175
        %v1178 = vmul.f32 %v1176, %v1176
        %v1179 = vmul.f32 %v1177, %v1177
        %1180 = vmatpush.msra.mxu0 %v1144
        %1181 = vmatpush.msra.mxu0 %v1143
        %1182 = vmatpush.msra.mxu0 %v1142
        %1183 = vmatpush.msra.mxu0 %v1141
        %1184 = vmatpush.msra.mxu0 %v1140
        %1185 = vmatpush.msra.mxu0 %v1139
        %1186 = vmatpush.msra.mxu0 %v1138
        %1187 = vmatpush.msra.mxu0 %v1137
        %1188 = vmatpush.msra.mxu0 %v1136
        %1189 = vmatpush.msra.mxu0 %v1135
        %1190 = vmatpush.msra.mxu0 %v1134
        %1191 = vmatpush.msra.mxu0 %v1133
        %1192 = vmatpush.msra.mxu0 %v1132
        %1193 = vmatpush.msra.mxu0 %v1131
        %1194 = vmatpush.msra.mxu0 %v1130
        %1195 = vmatpush.msra.mxu0 %v1129
        %1196 = vmatmul.f32.gmra.mxu0 %v1178
        %v1197 = vpop.f32.mrf.mxu0
        %v1198 = vadd.f32 0.0, %v1197
        %1199 = vmatmul.f32.gmra.mxu0 %v1179
        %v1200 = vpop.f32.mrf.mxu0
        %v1201 = vadd.f32 0.0, %v1200
        %1202 = vdwg.mxu0
        %v1203 = vadd.f32 %v1198, %v1201
        %v1204 = vrot.slane %v1203, 4
        %v1205 = vadd.f32 %v1203, %v1204
        %v1206 = vrot.slane %v1205, 2
        %v1207 = vadd.f32 %v1205, %v1206
        %v1208 = vrot.slane %v1207, 1
        %v1209 = vadd.f32 %v1207, %v1208
        %v1210 = vmul.f32 %v1209, 0.003921569
        %v1211 = vadd.f32 %v1210, 0.0001
        %v1212 = vmul.f32 %v1211, 4.0
        %v1213 = vrcp.pop %v1212
        %v1214 = vmul.f32 %v1178, %v1213
        %v1215 = vmul.f32 %v1179, %v1213
        %v1216 = vadd.f32 %v1214, 0.5
        %v1217 = vadd.f32 %v1215, 0.5
        %v1218 = vxor.u32 %v1216, 2147483648
        %v1219 = vxor.u32 %v1217, 2147483648
        %v1220 = vmul.f32 %v1218, 1.442695
        %v1221 = vpow.pop %v1220
        %v1222 = vmul.f32 %v1219, 1.442695
        %v1223 = vpow.pop %v1222
        %v1224 = vadd.f32 %v1221, 1.0
        %v1225 = vadd.f32 %v1223, 1.0
        %v1226 = vrcp.pop %v1224
        %v1227 = vmul.f32 %v1224, %v1226
        %v1228 = vsub.f32 1.0, %v1227
        %v1229 = vmul.f32 %v1226, %v1228
        %v1230 = vadd.f32 %v1226, %v1229
        %vm1231 = vweird.f32 %v1224
        %vm1232 = vweird.f32 %v1226
        %vm1233 = vmor %vm1231, %vm1232
        %v1234 = vsel %vm1233, %v1226, %v1230
        %v1235 = vand.u32 2147483647, %v1224
        %vm1236 = vcmp.eq.f32.partialorder %v1235, 8.507059e+37
        %v1237 = vand.u32 %v1224, 2147483648
        %v1238 = vor.u32 1.1754944e-38, %v1237
        %v1239 = vsel %vm1236, %v1238, %v1234
        %v1240 = vmul.f32 1.0, %v1239
        %v1241 = vrcp.pop %v1225
        %v1242 = vmul.f32 %v1225, %v1241
        %v1243 = vsub.f32 1.0, %v1242
        %v1244 = vmul.f32 %v1241, %v1243
        %v1245 = vadd.f32 %v1241, %v1244
        %vm1246 = vweird.f32 %v1225
        %vm1247 = vweird.f32 %v1241
        %vm1248 = vmor %vm1246, %vm1247
        %v1249 = vsel %vm1248, %v1241, %v1245
        %v1250 = vand.u32 2147483647, %v1225
        %vm1251 = vcmp.eq.f32.partialorder %v1250, 8.507059e+37
        %v1252 = vand.u32 %v1225, 2147483648
        %v1253 = vor.u32 1.1754944e-38, %v1252
        %v1254 = vsel %vm1251, %v1253, %v1249
        %v1255 = vmul.f32 1.0, %v1254
        %v1256 = vmul.f32 %v1125, %v1240
        %v1257 = vmul.f32 %v1127, %v1255
        %v1258 = vld [vmem:[%s6] sm:$0x1]
        %v1260 = vperm.slane %v1258, 0
        %v1262 = vmul.f32 %v1256, %v1260
        %v1263 = vmul.f32 %v1257, %v1260
        %v1264 = vld [vmem:[%s7] sm:$0x1]
        %v1266 = vperm.slane %v1264, 0
        %v1268 = vadd.f32 %v1262, %v1266
        %v1269 = vadd.f32 %v1263, %v1266
        %v1270 = vld [vmem:[%s461 + $0x1] sm:$0xff]
        %v1271 = vld [vmem:[%s461 + $0x9] sm:$0xff]
        %v1272 = vpack.c.bf16 %v1271, %v1270
        %v1273 = vld [vmem:[%s8] sm:$0xf]
        %v1274 = vld [vmem:[%s8 + $0x4] sm:$0xf]
        %v1275 = vld [vmem:[%s8 + $0x8] sm:$0xf]
        %v1276 = vld [vmem:[%s8 + $0xc] sm:$0xf]
        %v1277 = vld [vmem:[%s8 + $0x10] sm:$0xf]
        %v1278 = vld [vmem:[%s8 + $0x14] sm:$0xf]
        %v1279 = vld [vmem:[%s8 + $0x18] sm:$0xf]
        %v1280 = vld [vmem:[%s8 + $0x1c] sm:$0xf]
        %1282 = vrot.lane.b32.xlu0 %v1272, 124
        %v1283 = vpop.permute.xlu0 %1282
        %v1292 = vunpack.c.l.b16 %v1273
        %v1293 = vunpack.c.l.b16 %v1274
        %v1294 = vunpack.c.l.b16 %v1275
        %v1295 = vunpack.c.l.b16 %v1276
        %v1296 = vunpack.c.l.b16 %v1277
        %v1297 = vunpack.c.l.b16 %v1278
        %v1298 = vunpack.c.l.b16 %v1279
        %v1299 = vunpack.c.l.b16 %v1280
        %v1300 = vpack.c.b16 %v1293, %v1292
        %v1301 = vpack.c.b16 %v1295, %v1294
        %v1302 = vpack.c.b16 %v1297, %v1296
        %v1303 = vpack.c.b16 %v1299, %v1298
        %vm1308 = vcmask 523264
        %v1310 = vsel %vm1308, %v1283, 0
        %1312 = vmatpush.bf16.msra.mxu0 0
        %1313 = vmatpush.bf16.msra.mxu0 0
        %1314 = vmatpush.bf16.msra.mxu0 0
        %1315 = vmatpush.bf16.msra.mxu0 0
        %1316 = vmatpush.bf16.msra.mxu0 %v1303
        %1317 = vmatpush.bf16.msra.mxu0 %v1302
        %1318 = vmatpush.bf16.msra.mxu0 %v1301
        %1319 = vmatpush.bf16.msra.mxu0 %v1300
        %1320 = vmatmul.bf16.gmra.mxu0 %v1310
        %v1321 = vpop.f32.mrf.mxu0
        %v1322 = vadd.f32 0.0, %v1321
        %v1323 = vpop.f32.mrf.mxu0
        %v1324 = vadd.f32 0.0, %v1323
        %1325 = vdwg.mxu0
        %v1326 = vld [vmem:[%s9] sm:$0x1]
        %v1328 = vperm.slane %v1326, 0
        %v1330 = vmul.f32 %v1322, %v1328
        %v1331 = vmul.f32 %v1324, %v1328
        %v1332 = vld [vmem:[%s10] sm:$0x1]
        %v1334 = vperm.slane %v1332, 0
        %v1336 = vadd.f32 %v1330, %v1334
        %v1337 = vadd.f32 %v1331, %v1334
        %v1338 = vadd.f32 %v1268, %v1336
        %v1339 = vadd.f32 %v1269, %v1337
        %v1340 = vxor.u32 %v1338, 2147483648
        %v1341 = vxor.u32 %v1339, 2147483648
        %v1342 = vmul.f32 %v1340, 1.442695
        %v1343 = vpow.pop %v1342
        %v1344 = vmul.f32 %v1341, 1.442695
        %v1345 = vpow.pop %v1344
        %v1346 = vadd.f32 %v1343, 1.0
        %v1347 = vadd.f32 %v1345, 1.0
        %v1348 = vrcp.pop %v1346
        %v1349 = vmul.f32 %v1346, %v1348
        %v1350 = vsub.f32 1.0, %v1349
        %v1351 = vmul.f32 %v1348, %v1350
        %v1352 = vadd.f32 %v1348, %v1351
        %vm1353 = vweird.f32 %v1346
        %vm1354 = vweird.f32 %v1348
        %vm1355 = vmor %vm1353, %vm1354
        %v1356 = vsel %vm1355, %v1348, %v1352
        %v1357 = vand.u32 2147483647, %v1346
        %vm1358 = vcmp.eq.f32.partialorder %v1357, 8.507059e+37
        %v1359 = vand.u32 %v1346, 2147483648
        %v1360 = vor.u32 1.1754944e-38, %v1359
        %v1361 = vsel %vm1358, %v1360, %v1356
        %v1362 = vmul.f32 1.0, %v1361
        %v1363 = vrcp.pop %v1347
        %v1364 = vmul.f32 %v1347, %v1363
        %v1365 = vsub.f32 1.0, %v1364
        %v1366 = vmul.f32 %v1363, %v1365
        %v1367 = vadd.f32 %v1363, %v1366
        %vm1368 = vweird.f32 %v1347
        %vm1369 = vweird.f32 %v1363
        %vm1370 = vmor %vm1368, %vm1369
        %v1371 = vsel %vm1370, %v1363, %v1367
        %v1372 = vand.u32 2147483647, %v1347
        %vm1373 = vcmp.eq.f32.partialorder %v1372, 8.507059e+37
        %v1374 = vand.u32 %v1347, 2147483648
        %v1375 = vor.u32 1.1754944e-38, %v1374
        %v1376 = vsel %vm1373, %v1375, %v1371
        %v1377 = vmul.f32 1.0, %v1376
        %v1378 = vmul.f32 %v1338, %v1362
        %v1379 = vmul.f32 %v1339, %v1377
        %1380 = vst [vmem:[%s456] sm:$0xff] %v1378
        %1381 = vst [vmem:[%s456 + $0x8] sm:$0xff] %v1379
        %s1382 = sand.u32 %s293, 1
        %s1383 = scalar_lea.sflag [#allocation7], %s1382
        %s1384 = sand.u32 %s293, 1
        %s1385 = smul.addr %s1384, 16
        %s1386 = scalar_lea.vmem [#allocation11], %s1385
        // Predicated region
        $region81: #{tpu_custom_call.1} parent=67 // pred_check
          %p1387 = pneg %p303
        $region82: #{tpu_custom_call.1} parent=67 // pred_check_branch
          %1389 = sbr.rel (%p1387) target = $region84
        $region83: #{tpu_custom_call.1} parent=67 // pred_region
          %1391 = vsyncadd %s1383, 0
          %s1392 = smul.addr %s28, 2
          %s1393 = smul.addr %s1392, 8
          %s1394 = scalar_lea.hbm %s12, %s1393
          %s1395 = sshll.u32 %s1386, 4
          %s1396 = int_to_ptr.vmem [resolvable:$true] %s1395
          %s1397 = sshll.u32 %s1394, 4
          %s1398 = int_to_ptr.hbm [resolvable:$true] %s1397
          %1403 = dma.vmem_to_hbm [thread:$0]  %s1396, 256, %s1398, %s1383, 128, 128, 8
        $region84: #{tpu_custom_call.1} parent=67 // pred_fallthru
          _
      $region68: #{tpu_custom_call.1} parent=5 // pred_fallthru
        _
      %p1404 = scmp.le.s32.totalorder 2, %s23
      // Predicated region
      $region85: #{tpu_custom_call.1} parent=5 // pred_check
        %p1405 = pneg %p1404
      $region86: #{tpu_custom_call.1} parent=5 // pred_check_branch
        %1407 = sbr.rel (%p1405) target = $region88
      $region87: #{tpu_custom_call.1} parent=5 // pred_region
        %s1408 = ssub.s32 %s23, 2
        // Predicated region
        $region89: #{tpu_custom_call.1} parent=87 // pred_check
          %p1409 = pneg %p309
        $region90: #{tpu_custom_call.1} parent=87 // pred_check_branch
          %1411 = sbr.rel (%p1409) target = $region92
        $region91: #{tpu_custom_call.1} parent=87 // pred_region
          %s1412 = sand.u32 %s294, 1
          %s1413 = scalar_lea.sflag [#allocation7], %s1412
          %s1414 = sand.u32 %s294, 1
          %s1415 = smul.addr %s1414, 16
          %s1416 = scalar_lea.vmem [#allocation11], %s1415
          %1418 = dma.done %s1413, 256
        $region92: #{tpu_custom_call.1} parent=87 // pred_fallthru
          _
      $region88: #{tpu_custom_call.1} parent=5 // pred_fallthru
        _
    $region6: #{tpu_custom_call.1} parent=1 // loop_footer
      %s27 = sadd.s32 1, %s23
    $region7: #{tpu_custom_call.1} parent=1 // loop_footer_branch
      %22 = sbr.rel target = $region3
    $region8: #{tpu_custom_call.1} parent=1 // loop_exit
      _
    %1419 = vsyncpa [#allocation6], 1
    %s1420 = scalar_lea.sflag [#allocation6], 1
    %1421 = vsyncpa %s1420, 1
    %1422 = vsyncpa [#allocation9], 1
    %1423 = vsyncpa [#allocation7], 1
    %s1424 = scalar_lea.sflag [#allocation7], 1
    %1425 = vsyncpa %s1424, 1

</llo_original>
